<compile_context>
chip_gen: v6e
topology: v6e:2x2x1
jax: 0.10.0
libtpu: 0.0.40
codegen_flags: <defaults>
</compile_context>

<pallas_src>
import functools

import jax
import jax.numpy as jnp
from jax.experimental import pallas as pl
from jax.experimental.pallas import tpu as pltpu

EPS = 1e-5


def make_divisible(v, divisor, min_value=None):
    if min_value is None:
        min_value = divisor
    new_v = max(min_value, int(v + divisor / 2) // divisor * divisor)
    if new_v < 0.9 * v:
        new_v += divisor
    return new_v


def _round_up(v, m):
    return ((v + m - 1) // m) * m


# ---------------------------------------------------------------------------
# Pallas kernel (fully lane-dense)
# ---------------------------------------------------------------------------
def _inverted_res_kernel(x2_ref,
                         w_pw_ref, b_pw_ref,
                         w_dw_ref, b_dw_ref,
                         w_red_ref, b_red_ref,
                         w_exp_ref, b_exp_ref,
                         w_lin_ref, b_lin_ref,
                         out_ref, pw_pad_ref, *, H, W, cmid2):
    Bt = x2_ref.shape[0]
    Wcin = x2_ref.shape[2]
    WC = W * cmid2
    Hp = pw_pad_ref.shape[1]
    Wl_pad = pw_pad_ref.shape[2]

    # --- 1x1 conv_pw (+BN+ReLU): lane-dense block-diagonal matmul (MXU) ------
    x2 = x2_ref[...].reshape(Bt * H, Wcin)
    pw = jnp.dot(x2, w_pw_ref[...], preferred_element_type=jnp.float32)
    pw = jnp.maximum(pw + b_pw_ref[...], 0.0)                  # (Bt*H, WC) f32
    pw_dense = pw.reshape(Bt, H, WC)

    # --- stage into zero-padded scratch: aligned interior store at (0, 0), ---
    # --- and re-zero only the pad border (bottom rows + right pad lanes).  ---
    pw_pad_ref[:, :H, :WC] = pw_dense
    pw_pad_ref[:, H:, :] = jnp.zeros((Bt, Hp - H, Wl_pad), jnp.float32)
    pw_pad_ref[:, :H, WC:] = jnp.zeros((Bt, H, Wl_pad - WC), jnp.float32)

    # --- 3x3 depthwise conv (+BN+ReLU): 9 taps via XLU rolls, VPU MACs -------
    padded = pw_pad_ref[...]                                   # single hoisted load
    w_dw = w_dw_ref[...]                                       # (9, WC)
    # bias fused into the accumulator init
    acc = jnp.broadcast_to(b_dw_ref[...].reshape(1, 1, WC), (Bt, H, WC))
    for ky in range(3):
        dy = ky - 1
        if dy == 0:
            rows = padded[:, :H, :]
        else:
            rows = pltpu.roll(padded, shift=(-dy) % Hp, axis=1)[:, :H, :]
        for kx in range(3):
            dx = kx - 1
            if dx == 0:
                tap = rows[:, :, :WC]
            else:
                tap = pltpu.roll(rows, shift=(-dx * cmid2) % Wl_pad,
                                 axis=2)[:, :, :WC]
            acc = acc + tap * w_dw[ky * 3 + kx].reshape(1, 1, WC)
    dw_dense = jnp.maximum(acc, 0.0)                           # (Bt, H, WC)

    # --- SqueezeExcite: fused reduce/expand matmuls, gate already W-tiled ----
    s_cat = jnp.concatenate([jnp.sum(pw_dense, axis=1),
                             jnp.sum(dw_dense, axis=1)], axis=-1)   # (Bt, 2*WC)
    se = jnp.dot(s_cat, w_red_ref[...], preferred_element_type=jnp.float32)
    se = jnp.maximum(se + b_red_ref[...], 0.0)                      # (Bt, red)
    gate = jax.nn.sigmoid(
        jnp.dot(se, w_exp_ref[...], preferred_element_type=jnp.float32)
        + b_exp_ref[...])                                           # (Bt, 2*WC)

    # --- gate + 1x1 conv_linear (+BN+ReLU): single fused K=2*WC matmul -------
    xg = jnp.concatenate([pw_dense, dw_dense], axis=-1) * gate[:, None, :]
    mm_dtype = w_lin_ref.dtype
    lin = jnp.dot(xg.reshape(Bt * H, 2 * WC).astype(mm_dtype), w_lin_ref[...],
                  preferred_element_type=jnp.float32) + b_lin_ref[...]
    out = jnp.maximum(lin, 0.0)                                 # (Bt*H, W*cout2)
    out_ref[...] = out.reshape(Bt, H, -1).astype(out_ref.dtype)  # lane-dense store


# ---------------------------------------------------------------------------
# Parameter setup / BN folding / lane-dense weight packing (plain JAX glue)
# ---------------------------------------------------------------------------
def init_params(key, in_ch, mid_ch, out_ch):
    cin2, cm, cout2 = in_ch // 2, mid_ch // 2, out_ch // 2
    red = make_divisible(mid_ch * 0.25, 4)
    ks = jax.random.split(key, 22)

    def nrm(k, shape, s=0.2):
        return s * jax.random.normal(k, shape, jnp.float32)

    def pos(k, shape):
        return jax.random.uniform(k, shape, jnp.float32, 0.5, 1.5)

    return dict(
        W_pw=nrm(ks[0], (cm, cin2, 1, 1)), b_pw=nrm(ks[1], (cm,)),
        bn_pw_gamma=pos(ks[2], (cm,)), bn_pw_beta=nrm(ks[3], (cm,)),
        bn_pw_mean=nrm(ks[4], (cm,)), bn_pw_var=pos(ks[5], (cm,)),
        W_dw=nrm(ks[6], (cm, 1, 3, 3)), b_dw=nrm(ks[7], (cm,)),
        bn_dw_gamma=pos(ks[8], (cm,)), bn_dw_beta=nrm(ks[9], (cm,)),
        bn_dw_mean=nrm(ks[10], (cm,)), bn_dw_var=pos(ks[11], (cm,)),
        W_red=nrm(ks[12], (red, mid_ch, 1, 1)), b_red=nrm(ks[13], (red,)),
        W_exp=nrm(ks[14], (mid_ch, red, 1, 1)), b_exp=nrm(ks[15], (mid_ch,)),
        W_lin=nrm(ks[16], (cout2, mid_ch, 1, 1)), b_lin=nrm(ks[17], (cout2,)),
        bn_lin_gamma=pos(ks[18], (cout2,)), bn_lin_beta=nrm(ks[19], (cout2,)),
        bn_lin_mean=nrm(ks[20], (cout2,)), bn_lin_var=pos(ks[21], (cout2,)),
    )


def fuse_params(p, mid_ch, H, W, compute_dtype=jnp.float32):
    """Fold BN and pre-pack weights into the lane-dense (W*C) layout."""
    cm = mid_ch // 2
    HW = H * W

    def bd(w2d):  # block-diagonalize (k, n) across the W pixel positions
        return jnp.kron(jnp.eye(W, dtype=w2d.dtype), w2d)

    s_pw = p['bn_pw_gamma'] / jnp.sqrt(p['bn_pw_var'] + EPS)
    w_pw = p['W_pw'][:, :, 0, 0].T * s_pw[None, :]                    # (cin2, cm)
    b_pw = (p['b_pw'] - p['bn_pw_mean']) * s_pw + p['bn_pw_beta']

    s_dw = p['bn_dw_gamma'] / jnp.sqrt(p['bn_dw_var'] + EPS)
    w_dw = p['W_dw'][:, 0, :, :].reshape(cm, 9).T * s_dw[None, :]     # (9, cm)
    b_dw = (p['b_dw'] - p['bn_dw_mean']) * s_dw + p['bn_dw_beta']

    w_red = p['W_red'][:, :, 0, 0].T                                  # (2cm, red)
    w_exp = p['W_exp'][:, :, 0, 0].T                                  # (red, 2cm)

    s_lin = p['bn_lin_gamma'] / jnp.sqrt(p['bn_lin_var'] + EPS)
    w_lin = p['W_lin'][:, :, 0, 0].T * s_lin[None, :]                 # (2cm, cout2)
    b_lin = (p['b_lin'] - p['bn_lin_mean']) * s_lin + p['bn_lin_beta']

    # 1/HW folded into the SE reduce weight; reduce/expand pre-tiled across W.
    w_red_dense = jnp.concatenate([jnp.tile(w_red[:cm], (W, 1)),
                                   jnp.tile(w_red[cm:], (W, 1))], axis=0) / HW
    w_exp_dense = jnp.concatenate([jnp.tile(w_exp[:, :cm], (1, W)),
                                   jnp.tile(w_exp[:, cm:], (1, W))], axis=1)
    b_exp_dense = jnp.concatenate([jnp.tile(p['b_exp'][:cm], W),
                                   jnp.tile(p['b_exp'][cm:], W)])[None, :]
    w_lin_blk = jnp.concatenate([bd(w_lin[:cm]), bd(w_lin[cm:])], axis=0)

    return dict(
        w_pw=bd(w_pw).astype(compute_dtype),         # (W*cin2, W*cm) block-diag
        b_pw=jnp.tile(b_pw, W)[None, :],              # (1, W*cm)
        w_dw=jnp.tile(w_dw, (1, W)),                  # (9, W*cm)
        b_dw=jnp.tile(b_dw, W)[None, :],
        w_red=w_red_dense,                            # (2*W*cm, red)
        b_red=p['b_red'][None, :],
        w_exp=w_exp_dense,                            # (red, 2*W*cm)
        b_exp=b_exp_dense,
        w_lin=w_lin_blk.astype(compute_dtype),        # (2*W*cm, W*cout2)
        b_lin=jnp.tile(b_lin, W)[None, :],
    )


def _tpu_generation():
    try:
        kind = jax.devices()[0].device_kind.lower()
    except Exception:
        return 6
    for g in (7, 6, 5, 4):
        if f"v{g}" in kind:
            return g
    return 6


def _pick_block_batch(B, per_image_bytes, budget_bytes, want_multi_step):
    divisors = [d for d in range(B, 0, -1) if B % d == 0]
    for d in divisors:
        if d * per_image_bytes > budget_bytes:
            continue
        steps = B // d
        if want_multi_step and B >= 2 and (steps < 2 or steps % 2 != 0):
            # prefer an even number (>=2) of grid steps so the "parallel"
            # batch axis shards cleanly across two TensorCores (v7x).
            continue
        return d
    for d in divisors:
        if d * per_image_bytes <= budget_bytes:
            return d
    return 1


# ---------------------------------------------------------------------------
# Wrapper (NCHW in / NCHW out, matching PyTorch semantics)
# ---------------------------------------------------------------------------
def inverted_res_forward(x_nchw, params, in_ch, mid_ch, out_ch, stride=1,
                         compute_dtype=jnp.float32):
    # TODO(synk): stride > 1 has no valid semantics here -- the reference
    # forward's torch.concat((x2, x3)) already requires stride == 1.
    assert stride == 1, "InvertedRes.forward concatenation requires stride == 1"
    B, _, H, W = x_nchw.shape
    cin2 = in_ch // 2
    cmid2 = mid_ch // 2

    fp = fuse_params(params, mid_ch, H, W, compute_dtype)
    Wcin = W * cin2
    WC = W * cmid2
    Wcout = fp['w_lin'].shape[1]
    cout2 = Wcout // W
    red = fp['w_red'].shape[1]
    Hp = _round_up(H + 1, 8)
    Wl_pad = _round_up(WC + cmid2, 128)

    out_dtype = (jnp.bfloat16 if jnp.dtype(compute_dtype) == jnp.dtype(jnp.bfloat16)
                 else jnp.float32)

    x1 = x_nchw[:, :cin2]
    # NCHW -> lane-dense channels-last: (B, H, W*cin2)
    x2 = jnp.transpose(x_nchw[:, cin2:], (0, 2, 3, 1)).reshape(B, H, Wcin)
    x2 = x2.astype(compute_dtype)

    weights = [fp['w_pw'], fp['b_pw'], fp['w_dw'], fp['b_dw'],
               fp['w_red'], fp['b_red'], fp['w_exp'], fp['b_exp'],
               fp['w_lin'], fp['b_lin']]

    # ---- generation-aware block-batch selection ----
    csize = jnp.dtype(compute_dtype).itemsize
    osize = jnp.dtype(out_dtype).itemsize
    per_image_bytes = (2 * H * Wcin * csize           # double-buffered input
                       + 2 * H * Wcout * osize        # double-buffered output
                       + Hp * Wl_pad * 4               # padded scratch
                       + 12 * H * Wl_pad * 4)          # working-value headroom
    gen = _tpu_generation()
    Bt = _pick_block_batch(B, per_image_bytes,
                           budget_bytes=24 * 1024 * 1024,
                           want_multi_step=(gen >= 7))

    def _const_spec(a):
        nd = a.ndim
        return pl.BlockSpec(a.shape, lambda i, _nd=nd: (0,) * _nd)

    flops_per_img = (2 * H * Wcin * WC                 # block-diag pointwise matmul
                     + 2 * 9 * H * WC                  # depthwise MACs
                     + 4 * 2 * WC * red                # SE matmuls
                     + 2 * H * (2 * WC) * Wcout        # block-diag linear matmul
                     + 12 * H * WC)                    # relu / gating / sums
    cost = pl.CostEstimate(
        flops=int(B * flops_per_img),
        transcendentals=int(B * 2 * WC),
        bytes_accessed=int(x2.size * x2.dtype.itemsize
                           + B * H * Wcout * osize
                           + sum(int(w.size) * w.dtype.itemsize for w in weights)))

    kernel = functools.partial(_inverted_res_kernel, H=H, W=W, cmid2=cmid2)
    out_dense = pl.pallas_call(
        kernel,
        out_shape=jax.ShapeDtypeStruct((B, H, Wcout), out_dtype),
        grid=(B // Bt,),
        in_specs=[pl.BlockSpec((Bt, H, Wcin), lambda i: (i, 0, 0))]
                 + [_const_spec(w) for w in weights],
        out_specs=pl.BlockSpec((Bt, H, Wcout), lambda i: (i, 0, 0)),
        scratch_shapes=[pltpu.VMEM((Bt, Hp, Wl_pad), jnp.float32)],
        compiler_params=pltpu.CompilerParams(
            dimension_semantics=("parallel",),
            vmem_limit_bytes=32 * 1024 * 1024),
        cost_estimate=cost,
    )(x2, *weights)

    # lane-dense (B, H, W*cout2) kernel output -> NCHW in the wrapper
    x3 = jnp.transpose(out_dense.reshape(B, H, W, cout2),
                       (0, 3, 1, 2)).astype(x_nchw.dtype)
    out = jnp.concatenate([x1, x3], axis=1)
    ct = out.shape[1]
    # channel_shuffle(out, groups=2)
    out = out.reshape(B, 2, ct // 2, H, W).transpose(0, 2, 1, 3, 4).reshape(B, ct, H, W)
    return out


# ---------------------------------------------------------------------------
# Pure-JAX reference (raw conv + explicit BN) for correctness checking
# ---------------------------------------------------------------------------
def inverted_res_reference(x_nchw, p, in_ch, mid_ch, out_ch):
    B, _, H, W = x_nchw.shape
    cin2 = in_ch // 2
    hi = jax.lax.Precision.HIGHEST

    def bn(x, g, b, m, v):
        return (x - m) / jnp.sqrt(v + EPS) * g + b

    x1 = x_nchw[:, :cin2]
    x2 = jnp.transpose(x_nchw[:, cin2:], (0, 2, 3, 1))           # NHWC

    pw = jnp.einsum('bhwi,oi->bhwo', x2, p['W_pw'][:, :, 0, 0], precision=hi) + p['b_pw']
    pw = jnp.maximum(bn(pw, p['bn_pw_gamma'], p['bn_pw_beta'],
                        p['bn_pw_mean'], p['bn_pw_var']), 0.0)

    xp = jnp.pad(pw, ((0, 0), (1, 1), (1, 1), (0, 0)))
    dw = jnp.zeros_like(pw)
    for ky in range(3):
        for kx in range(3):
            dw = dw + xp[:, ky:ky + H, kx:kx + W, :] * p['W_dw'][:, 0, ky, kx]
    dw = dw + p['b_dw']
    dw = jnp.maximum(bn(dw, p['bn_dw_gamma'], p['bn_dw_beta'],
                        p['bn_dw_mean'], p['bn_dw_var']), 0.0)

    x3 = jnp.concatenate([pw, dw], axis=-1)
    se = jnp.mean(x3, axis=(1, 2), keepdims=True)
    se = jnp.einsum('bhwi,oi->bhwo', se, p['W_red'][:, :, 0, 0], precision=hi) + p['b_red']
    se = jnp.maximum(se, 0.0)
    se = jnp.einsum('bhwi,oi->bhwo', se, p['W_exp'][:, :, 0, 0], precision=hi) + p['b_exp']
    x3 = x3 * jax.nn.sigmoid(se)

    lin = jnp.einsum('bhwi,oi->bhwo', x3, p['W_lin'][:, :, 0, 0], precision=hi) + p['b_lin']
    lin = jnp.maximum(bn(lin, p['bn_lin_gamma'], p['bn_lin_beta'],
                         p['bn_lin_mean'], p['bn_lin_var']), 0.0)

    x3n = jnp.transpose(lin, (0, 3, 1, 2))
    out = jnp.concatenate([x1, x3n], axis=1)
    ct = out.shape[1]
    out = out.reshape(B, 2, ct // 2, H, W).transpose(0, 2, 1, 3, 4).reshape(B, ct, H, W)
    return out


if __name__ == "__main__":
    # Small config; W * (mid_ch//2) = 128 lanes => fully lane-dense kernel.
    B, in_ch, mid_ch, out_ch, H, W = 4, 16, 16, 16, 16, 16

    key = jax.random.PRNGKey(0)
    kx_, kp = jax.random.split(key)
    x = jax.random.normal(kx_, (B, in_ch, H, W), jnp.float32)
    params = init_params(kp, in_ch, mid_ch, out_ch)

    ref = jax.block_until_ready(inverted_res_reference(x, params, in_ch, mid_ch, out_ch))

    # f32 path
    out_f32 = jax.block_until_ready(
        inverted_res_forward(x, params, in_ch, mid_ch, out_ch, stride=1,
                             compute_dtype=jnp.float32))
    assert out_f32.shape == ref.shape, (out_f32.shape, ref.shape)
    err_f32 = float(jnp.max(jnp.abs(out_f32 - ref)))
    assert err_f32 < 2e-2, f"f32 mismatch vs reference: {err_f32}"

    # bf16 MXU-input / bf16-output path (skipped on v5e and older: no bf16 VPU).
    if _tpu_generation() >= 6:
        out_bf16 = jax.block_until_ready(
            inverted_res_forward(x, params, in_ch, mid_ch, out_ch, stride=1,
                                 compute_dtype=jnp.bfloat16))
        ref_scale = float(jnp.max(jnp.abs(ref))) + 1e-6
        rel_bf16 = float(jnp.max(jnp.abs(out_bf16.astype(jnp.float32) - ref))) / ref_scale
        assert rel_bf16 < 0.1, f"bf16 relative mismatch vs reference: {rel_bf16}"

    print("KERNEL_OK")
</pallas_src>

<mosaic_0001>
module attributes {stable_mosaic.version = 11 : i64} {
  func.func @_inverted_res_kernel(%arg0: i32, %arg1: memref<4x16x128xf32, #tpu.memory_space<vmem>>, %arg2: memref<128x128xf32, #tpu.memory_space<vmem>>, %arg3: memref<1x128xf32, #tpu.memory_space<vmem>>, %arg4: memref<9x128xf32, #tpu.memory_space<vmem>>, %arg5: memref<1x128xf32, #tpu.memory_space<vmem>>, %arg6: memref<256x4xf32, #tpu.memory_space<vmem>>, %arg7: memref<1x4xf32, #tpu.memory_space<vmem>>, %arg8: memref<4x256xf32, #tpu.memory_space<vmem>>, %arg9: memref<1x256xf32, #tpu.memory_space<vmem>>, %arg10: memref<256x128xf32, #tpu.memory_space<vmem>>, %arg11: memref<1x128xf32, #tpu.memory_space<vmem>>, %arg12: memref<4x16x128xf32, #tpu.memory_space<vmem>>, %arg13: memref<4x24x256xf32, #tpu.memory_space<vmem>>) attributes {dimension_semantics = [#tpu.dimension_semantics<parallel>], iteration_bounds = array<i64: 1>, scalar_prefetch = 0 : i64, scratch_operands = 1 : i64, tpu.core_type = #tpu.core_type<tc>, window_params = [{transform_indices = @transform_0, window_bounds = array<i64: 4, 16, 128>}, {pipeline_mode = #tpu.pipeline_mode<synchronous>, transform_indices = @transform_1, window_bounds = array<i64: 128, 128>}, {pipeline_mode = #tpu.pipeline_mode<synchronous>, transform_indices = @transform_2, window_bounds = array<i64: 1, 128>}, {pipeline_mode = #tpu.pipeline_mode<synchronous>, transform_indices = @transform_3, window_bounds = array<i64: 9, 128>}, {pipeline_mode = #tpu.pipeline_mode<synchronous>, transform_indices = @transform_4, window_bounds = array<i64: 1, 128>}, {pipeline_mode = #tpu.pipeline_mode<synchronous>, transform_indices = @transform_5, window_bounds = array<i64: 256, 4>}, {pipeline_mode = #tpu.pipeline_mode<synchronous>, transform_indices = @transform_6, window_bounds = array<i64: 1, 4>}, {pipeline_mode = #tpu.pipeline_mode<synchronous>, transform_indices = @transform_7, window_bounds = array<i64: 4, 256>}, {pipeline_mode = #tpu.pipeline_mode<synchronous>, transform_indices = @transform_8, window_bounds = array<i64: 1, 256>}, {pipeline_mode = #tpu.pipeline_mode<synchronous>, transform_indices = @transform_9, window_bounds = array<i64: 256, 128>}, {pipeline_mode = #tpu.pipeline_mode<synchronous>, transform_indices = @transform_10, window_bounds = array<i64: 1, 128>}, {transform_indices = @transform_11, window_bounds = array<i64: 4, 16, 128>}]} {
    %c0 = arith.constant 0 : index
    %c0_0 = arith.constant 0 : index
    %c0_1 = arith.constant 0 : index
    %0 = vector.load %arg1[%c0, %c0_0, %c0_1] : memref<4x16x128xf32, #tpu.memory_space<vmem>>, vector<4x16x128xf32>
    %1 = vector.shape_cast %0 : vector<4x16x128xf32> to vector<64x128xf32>
    %c0_2 = arith.constant 0 : index
    %c0_3 = arith.constant 0 : index
    %2 = vector.load %arg2[%c0_2, %c0_3] : memref<128x128xf32, #tpu.memory_space<vmem>>, vector<128x128xf32>
    %cst = arith.constant dense<0.000000e+00> : vector<64x128xf32>
    %3 = tpu.matmul %1, %2, %cst {dimension_numbers = #tpu.dot_dimension_numbers<[1], [0], [0], [1], [0, 0, 1, 1], [], []>} : vector<64x128xf32>, vector<128x128xf32>, vector<64x128xf32> -> vector<64x128xf32>
    %c0_4 = arith.constant 0 : index
    %c0_5 = arith.constant 0 : index
    %4 = vector.load %arg3[%c0_4, %c0_5] : memref<1x128xf32, #tpu.memory_space<vmem>>, vector<1x128xf32>
    %5 = vector.broadcast %4 : vector<1x128xf32> to vector<64x128xf32>
    %6 = arith.addf %3, %5 : vector<64x128xf32>
    %cst_6 = arith.constant 0.000000e+00 : f32
    %7 = vector.broadcast %cst_6 : f32 to vector<64x128xf32>
    %8 = arith.maximumf %6, %7 : vector<64x128xf32>
    %9 = vector.shape_cast %8 : vector<64x128xf32> to vector<4x16x128xf32>
    %c0_7 = arith.constant 0 : index
    %c0_8 = arith.constant 0 : index
    %c0_9 = arith.constant 0 : index
    %10 = vector.load %arg13[%c0_7, %c0_8, %c0_9] : memref<4x24x256xf32, #tpu.memory_space<vmem>>, vector<4x16x128xf32>
    tpu.vector_store %arg13[%c0_7, %c0_8, %c0_9], %9 {strides = array<i32>} : memref<4x24x256xf32, #tpu.memory_space<vmem>>, vector<4x16x128xf32>,
    %cst_10 = arith.constant 0.000000e+00 : f32
    %11 = vector.broadcast %cst_10 : f32 to vector<4x8x256xf32>
    %c0_11 = arith.constant 0 : index
    %c16 = arith.constant 16 : index
    %c0_12 = arith.constant 0 : index
    %12 = vector.load %arg13[%c0_11, %c16, %c0_12] : memref<4x24x256xf32, #tpu.memory_space<vmem>>, vector<4x8x256xf32>
    tpu.vector_store %arg13[%c0_11, %c16, %c0_12], %11 {strides = array<i32>} : memref<4x24x256xf32, #tpu.memory_space<vmem>>, vector<4x8x256xf32>,
    %cst_13 = arith.constant 0.000000e+00 : f32
    %13 = vector.broadcast %cst_13 : f32 to vector<4x16x128xf32>
    %c0_14 = arith.constant 0 : index
    %c0_15 = arith.constant 0 : index
    %c128 = arith.constant 128 : index
    %14 = vector.load %arg13[%c0_14, %c0_15, %c128] : memref<4x24x256xf32, #tpu.memory_space<vmem>>, vector<4x16x128xf32>
    tpu.vector_store %arg13[%c0_14, %c0_15, %c128], %13 {strides = array<i32>} : memref<4x24x256xf32, #tpu.memory_space<vmem>>, vector<4x16x128xf32>,
    %c0_16 = arith.constant 0 : index
    %c0_17 = arith.constant 0 : index
    %c0_18 = arith.constant 0 : index
    %15 = vector.load %arg13[%c0_16, %c0_17, %c0_18] : memref<4x24x256xf32, #tpu.memory_space<vmem>>, vector<4x24x256xf32>
    %c0_19 = arith.constant 0 : index
    %c0_20 = arith.constant 0 : index
    %16 = vector.load %arg4[%c0_19, %c0_20] : memref<9x128xf32, #tpu.memory_space<vmem>>, vector<9x128xf32>
    %c0_21 = arith.constant 0 : index
    %c0_22 = arith.constant 0 : index
    %17 = vector.load %arg5[%c0_21, %c0_22] : memref<1x128xf32, #tpu.memory_space<vmem>>, vector<1x128xf32>
    %18 = vector.shape_cast %17 : vector<1x128xf32> to vector<1x1x128xf32>
    %19 = vector.shape_cast %18 : vector<1x1x128xf32> to vector<1x1x128xf32>
    %20 = vector.broadcast %19 : vector<1x1x128xf32> to vector<4x16x128xf32>
    %c1_i32 = arith.constant 1 : i32
    %21 = tpu.dynamic_rotate %15 by %c1_i32 dim 1 : vector<4x24x256xf32>, i32 -> vector<4x24x256xf32>
    %22 = vector.extract_strided_slice %21 {offsets = [0, 0, 0], sizes = [4, 16, 256], strides = [1, 1, 1]} : vector<4x24x256xf32> to vector<4x16x256xf32>
    %c8_i32 = arith.constant 8 : i32
    %23 = tpu.dynamic_rotate %22 by %c8_i32 dim 2 : vector<4x16x256xf32>, i32 -> vector<4x16x256xf32>
    %24 = vector.extract_strided_slice %23 {offsets = [0, 0, 0], sizes = [4, 16, 128], strides = [1, 1, 1]} : vector<4x16x256xf32> to vector<4x16x128xf32>
    %25 = vector.extract_strided_slice %16 {offsets = [0, 0], sizes = [1, 128], strides = [1, 1]} : vector<9x128xf32> to vector<1x128xf32>
    %26 = vector.shape_cast %25 : vector<1x128xf32> to vector<128xf32>
    %27 = vector.shape_cast %26 : vector<128xf32> to vector<1x1x128xf32>
    %28 = vector.broadcast %27 : vector<1x1x128xf32> to vector<4x16x128xf32>
    %29 = arith.mulf %24, %28 : vector<4x16x128xf32>
    %30 = arith.addf %20, %29 : vector<4x16x128xf32>
    %31 = vector.extract_strided_slice %22 {offsets = [0, 0, 0], sizes = [4, 16, 128], strides = [1, 1, 1]} : vector<4x16x256xf32> to vector<4x16x128xf32>
    %32 = vector.extract_strided_slice %16 {offsets = [1, 0], sizes = [1, 128], strides = [1, 1]} : vector<9x128xf32> to vector<1x128xf32>
    %33 = vector.shape_cast %32 : vector<1x128xf32> to vector<128xf32>
    %34 = vector.shape_cast %33 : vector<128xf32> to vector<1x1x128xf32>
    %35 = vector.broadcast %34 : vector<1x1x128xf32> to vector<4x16x128xf32>
    %36 = arith.mulf %31, %35 : vector<4x16x128xf32>
    %37 = arith.addf %30, %36 : vector<4x16x128xf32>
    %c248_i32 = arith.constant 248 : i32
    %38 = tpu.dynamic_rotate %22 by %c248_i32 dim 2 : vector<4x16x256xf32>, i32 -> vector<4x16x256xf32>
    %39 = vector.extract_strided_slice %38 {offsets = [0, 0, 0], sizes = [4, 16, 128], strides = [1, 1, 1]} : vector<4x16x256xf32> to vector<4x16x128xf32>
    %40 = vector.extract_strided_slice %16 {offsets = [2, 0], sizes = [1, 128], strides = [1, 1]} : vector<9x128xf32> to vector<1x128xf32>
    %41 = vector.shape_cast %40 : vector<1x128xf32> to vector<128xf32>
    %42 = vector.shape_cast %41 : vector<128xf32> to vector<1x1x128xf32>
    %43 = vector.broadcast %42 : vector<1x1x128xf32> to vector<4x16x128xf32>
    %44 = arith.mulf %39, %43 : vector<4x16x128xf32>
    %45 = arith.addf %37, %44 : vector<4x16x128xf32>
    %46 = vector.extract_strided_slice %15 {offsets = [0, 0, 0], sizes = [4, 16, 256], strides = [1, 1, 1]} : vector<4x24x256xf32> to vector<4x16x256xf32>
    %c8_i32_23 = arith.constant 8 : i32
    %47 = tpu.dynamic_rotate %46 by %c8_i32_23 dim 2 : vector<4x16x256xf32>, i32 -> vector<4x16x256xf32>
    %48 = vector.extract_strided_slice %47 {offsets = [0, 0, 0], sizes = [4, 16, 128], strides = [1, 1, 1]} : vector<4x16x256xf32> to vector<4x16x128xf32>
    %49 = vector.extract_strided_slice %16 {offsets = [3, 0], sizes = [1, 128], strides = [1, 1]} : vector<9x128xf32> to vector<1x128xf32>
    %50 = vector.shape_cast %49 : vector<1x128xf32> to vector<128xf32>
    %51 = vector.shape_cast %50 : vector<128xf32> to vector<1x1x128xf32>
    %52 = vector.broadcast %51 : vector<1x1x128xf32> to vector<4x16x128xf32>
    %53 = arith.mulf %48, %52 : vector<4x16x128xf32>
    %54 = arith.addf %45, %53 : vector<4x16x128xf32>
    %55 = vector.extract_strided_slice %46 {offsets = [0, 0, 0], sizes = [4, 16, 128], strides = [1, 1, 1]} : vector<4x16x256xf32> to vector<4x16x128xf32>
    %56 = vector.extract_strided_slice %16 {offsets = [4, 0], sizes = [1, 128], strides = [1, 1]} : vector<9x128xf32> to vector<1x128xf32>
    %57 = vector.shape_cast %56 : vector<1x128xf32> to vector<128xf32>
    %58 = vector.shape_cast %57 : vector<128xf32> to vector<1x1x128xf32>
    %59 = vector.broadcast %58 : vector<1x1x128xf32> to vector<4x16x128xf32>
    %60 = arith.mulf %55, %59 : vector<4x16x128xf32>
    %61 = arith.addf %54, %60 : vector<4x16x128xf32>
    %c248_i32_24 = arith.constant 248 : i32
    %62 = tpu.dynamic_rotate %46 by %c248_i32_24 dim 2 : vector<4x16x256xf32>, i32 -> vector<4x16x256xf32>
    %63 = vector.extract_strided_slice %62 {offsets = [0, 0, 0], sizes = [4, 16, 128], strides = [1, 1, 1]} : vector<4x16x256xf32> to vector<4x16x128xf32>
    %64 = vector.extract_strided_slice %16 {offsets = [5, 0], sizes = [1, 128], strides = [1, 1]} : vector<9x128xf32> to vector<1x128xf32>
    %65 = vector.shape_cast %64 : vector<1x128xf32> to vector<128xf32>
    %66 = vector.shape_cast %65 : vector<128xf32> to vector<1x1x128xf32>
    %67 = vector.broadcast %66 : vector<1x1x128xf32> to vector<4x16x128xf32>
    %68 = arith.mulf %63, %67 : vector<4x16x128xf32>
    %69 = arith.addf %61, %68 : vector<4x16x128xf32>
    %c23_i32 = arith.constant 23 : i32
    %70 = tpu.dynamic_rotate %15 by %c23_i32 dim 1 : vector<4x24x256xf32>, i32 -> vector<4x24x256xf32>
    %71 = vector.extract_strided_slice %70 {offsets = [0, 0, 0], sizes = [4, 16, 256], strides = [1, 1, 1]} : vector<4x24x256xf32> to vector<4x16x256xf32>
    %c8_i32_25 = arith.constant 8 : i32
    %72 = tpu.dynamic_rotate %71 by %c8_i32_25 dim 2 : vector<4x16x256xf32>, i32 -> vector<4x16x256xf32>
    %73 = vector.extract_strided_slice %72 {offsets = [0, 0, 0], sizes = [4, 16, 128], strides = [1, 1, 1]} : vector<4x16x256xf32> to vector<4x16x128xf32>
    %74 = vector.extract_strided_slice %16 {offsets = [6, 0], sizes = [1, 128], strides = [1, 1]} : vector<9x128xf32> to vector<1x128xf32>
    %75 = vector.shape_cast %74 : vector<1x128xf32> to vector<128xf32>
    %76 = vector.shape_cast %75 : vector<128xf32> to vector<1x1x128xf32>
    %77 = vector.broadcast %76 : vector<1x1x128xf32> to vector<4x16x128xf32>
    %78 = arith.mulf %73, %77 : vector<4x16x128xf32>
    %79 = arith.addf %69, %78 : vector<4x16x128xf32>
    %80 = vector.extract_strided_slice %71 {offsets = [0, 0, 0], sizes = [4, 16, 128], strides = [1, 1, 1]} : vector<4x16x256xf32> to vector<4x16x128xf32>
    %81 = vector.extract_strided_slice %16 {offsets = [7, 0], sizes = [1, 128], strides = [1, 1]} : vector<9x128xf32> to vector<1x128xf32>
    %82 = vector.shape_cast %81 : vector<1x128xf32> to vector<128xf32>
    %83 = vector.shape_cast %82 : vector<128xf32> to vector<1x1x128xf32>
    %84 = vector.broadcast %83 : vector<1x1x128xf32> to vector<4x16x128xf32>
    %85 = arith.mulf %80, %84 : vector<4x16x128xf32>
    %86 = arith.addf %79, %85 : vector<4x16x128xf32>
    %c248_i32_26 = arith.constant 248 : i32
    %87 = tpu.dynamic_rotate %71 by %c248_i32_26 dim 2 : vector<4x16x256xf32>, i32 -> vector<4x16x256xf32>
    %88 = vector.extract_strided_slice %87 {offsets = [0, 0, 0], sizes = [4, 16, 128], strides = [1, 1, 1]} : vector<4x16x256xf32> to vector<4x16x128xf32>
    %89 = vector.extract_strided_slice %16 {offsets = [8, 0], sizes = [1, 128], strides = [1, 1]} : vector<9x128xf32> to vector<1x128xf32>
    %90 = vector.shape_cast %89 : vector<1x128xf32> to vector<128xf32>
    %91 = vector.shape_cast %90 : vector<128xf32> to vector<1x1x128xf32>
    %92 = vector.broadcast %91 : vector<1x1x128xf32> to vector<4x16x128xf32>
    %93 = arith.mulf %88, %92 : vector<4x16x128xf32>
    %94 = arith.addf %86, %93 : vector<4x16x128xf32>
    %cst_27 = arith.constant 0.000000e+00 : f32
    %95 = vector.broadcast %cst_27 : f32 to vector<4x16x128xf32>
    %96 = arith.maximumf %94, %95 : vector<4x16x128xf32>
    %cst_28 = arith.constant dense<0.000000e+00> : vector<4x128xf32>
    %97 = vector.multi_reduction <add>, %9, %cst_28 [1] : vector<4x16x128xf32> to vector<4x128xf32>
    %cst_29 = arith.constant dense<0.000000e+00> : vector<4x128xf32>
    %98 = vector.multi_reduction <add>, %96, %cst_29 [1] : vector<4x16x128xf32> to vector<4x128xf32>
    %99 = tpu.concatenate %97, %98 in 1 : vector<4x128xf32>, vector<4x128xf32> -> vector<4x256xf32>
    %c0_30 = arith.constant 0 : index
    %c0_31 = arith.constant 0 : index
    %100 = vector.load %arg6[%c0_30, %c0_31] : memref<256x4xf32, #tpu.memory_space<vmem>>, vector<256x4xf32>
    %cst_32 = arith.constant dense<0.000000e+00> : vector<4x4xf32>
    %101 = tpu.matmul %99, %100, %cst_32 {dimension_numbers = #tpu.dot_dimension_numbers<[1], [0], [0], [1], [0, 0, 1, 1], [], []>} : vector<4x256xf32>, vector<256x4xf32>, vector<4x4xf32> -> vector<4x4xf32>
    %c0_33 = arith.constant 0 : index
    %c0_34 = arith.constant 0 : index
    %102 = vector.load %arg7[%c0_33, %c0_34] : memref<1x4xf32, #tpu.memory_space<vmem>>, vector<1x4xf32>
    %103 = vector.broadcast %102 : vector<1x4xf32> to vector<4x4xf32>
    %104 = arith.addf %101, %103 : vector<4x4xf32>
    %cst_35 = arith.constant 0.000000e+00 : f32
    %105 = vector.broadcast %cst_35 : f32 to vector<4x4xf32>
    %106 = arith.maximumf %104, %105 : vector<4x4xf32>
    %c0_36 = arith.constant 0 : index
    %c0_37 = arith.constant 0 : index
    %107 = vector.load %arg8[%c0_36, %c0_37] : memref<4x256xf32, #tpu.memory_space<vmem>>, vector<4x256xf32>
    %cst_38 = arith.constant dense<0.000000e+00> : vector<4x256xf32>
    %108 = tpu.matmul %106, %107, %cst_38 {dimension_numbers = #tpu.dot_dimension_numbers<[1], [0], [0], [1], [0, 0, 1, 1], [], []>} : vector<4x4xf32>, vector<4x256xf32>, vector<4x256xf32> -> vector<4x256xf32>
    %c0_39 = arith.constant 0 : index
    %c0_40 = arith.constant 0 : index
    %109 = vector.load %arg9[%c0_39, %c0_40] : memref<1x256xf32, #tpu.memory_space<vmem>>, vector<1x256xf32>
    %110 = vector.broadcast %109 : vector<1x256xf32> to vector<4x256xf32>
    %111 = arith.addf %108, %110 : vector<4x256xf32>
    %112 = arith.negf %111 : vector<4x256xf32>
    %113 = math.exp %112 : vector<4x256xf32>
    %cst_41 = arith.constant 1.000000e+00 : f32
    %114 = vector.broadcast %cst_41 : f32 to vector<4x256xf32>
    %115 = arith.addf %114, %113 : vector<4x256xf32>
    %116 = arith.divf %114, %115 : vector<4x256xf32>
    %117 = tpu.concatenate %9, %96 in 2 : vector<4x16x128xf32>, vector<4x16x128xf32> -> vector<4x16x256xf32>
    %118 = vector.shape_cast %116 : vector<4x256xf32> to vector<4x1x256xf32>
    %119 = vector.broadcast %118 : vector<4x1x256xf32> to vector<4x16x256xf32>
    %120 = arith.mulf %117, %119 : vector<4x16x256xf32>
    %121 = vector.shape_cast %120 : vector<4x16x256xf32> to vector<64x256xf32>
    %c0_42 = arith.constant 0 : index
    %c0_43 = arith.constant 0 : index
    %122 = vector.load %arg10[%c0_42, %c0_43] : memref<256x128xf32, #tpu.memory_space<vmem>>, vector<256x128xf32>
    %cst_44 = arith.constant dense<0.000000e+00> : vector<64x128xf32>
    %123 = tpu.matmul %121, %122, %cst_44 {dimension_numbers = #tpu.dot_dimension_numbers<[1], [0], [0], [1], [0, 0, 1, 1], [], []>} : vector<64x256xf32>, vector<256x128xf32>, vector<64x128xf32> -> vector<64x128xf32>
    %c0_45 = arith.constant 0 : index
    %c0_46 = arith.constant 0 : index
    %124 = vector.load %arg11[%c0_45, %c0_46] : memref<1x128xf32, #tpu.memory_space<vmem>>, vector<1x128xf32>
    %125 = vector.broadcast %124 : vector<1x128xf32> to vector<64x128xf32>
    %126 = arith.addf %123, %125 : vector<64x128xf32>
    %cst_47 = arith.constant 0.000000e+00 : f32
    %127 = vector.broadcast %cst_47 : f32 to vector<64x128xf32>
    %128 = arith.maximumf %126, %127 : vector<64x128xf32>
    %129 = vector.shape_cast %128 : vector<64x128xf32> to vector<4x16x128xf32>
    %c0_48 = arith.constant 0 : index
    %c0_49 = arith.constant 0 : index
    %c0_50 = arith.constant 0 : index
    %130 = vector.load %arg12[%c0_48, %c0_49, %c0_50] : memref<4x16x128xf32, #tpu.memory_space<vmem>>, vector<4x16x128xf32>
    tpu.vector_store %arg12[%c0_48, %c0_49, %c0_50], %129 {strides = array<i32>} : memref<4x16x128xf32, #tpu.memory_space<vmem>>, vector<4x16x128xf32>,
    return
  }
  func.func @transform_0(%arg0: i32) -> (i32, i32, i32) {
    %c0_i32 = arith.constant 0 : i32
    %c0_i32_0 = arith.constant 0 : i32
    %c0_i32_1 = arith.constant 0 : i32
    return %arg0, %c0_i32, %c0_i32_0 : i32, i32, i32
  }
  func.func @transform_1(%arg0: i32) -> (i32, i32) {
    %c0_i32 = arith.constant 0 : i32
    %c0_i32_0 = arith.constant 0 : i32
    %c0_i32_1 = arith.constant 0 : i32
    return %c0_i32, %c0_i32_0 : i32, i32
  }
  func.func @transform_2(%arg0: i32) -> (i32, i32) {
    %c0_i32 = arith.constant 0 : i32
    %c0_i32_0 = arith.constant 0 : i32
    %c0_i32_1 = arith.constant 0 : i32
    return %c0_i32, %c0_i32_0 : i32, i32
  }
  func.func @transform_3(%arg0: i32) -> (i32, i32) {
    %c0_i32 = arith.constant 0 : i32
    %c0_i32_0 = arith.constant 0 : i32
    %c0_i32_1 = arith.constant 0 : i32
    return %c0_i32, %c0_i32_0 : i32, i32
  }
  func.func @transform_4(%arg0: i32) -> (i32, i32) {
    %c0_i32 = arith.constant 0 : i32
    %c0_i32_0 = arith.constant 0 : i32
    %c0_i32_1 = arith.constant 0 : i32
    return %c0_i32, %c0_i32_0 : i32, i32
  }
  func.func @transform_5(%arg0: i32) -> (i32, i32) {
    %c0_i32 = arith.constant 0 : i32
    %c0_i32_0 = arith.constant 0 : i32
    %c0_i32_1 = arith.constant 0 : i32
    return %c0_i32, %c0_i32_0 : i32, i32
  }
  func.func @transform_6(%arg0: i32) -> (i32, i32) {
    %c0_i32 = arith.constant 0 : i32
    %c0_i32_0 = arith.constant 0 : i32
    %c0_i32_1 = arith.constant 0 : i32
    return %c0_i32, %c0_i32_0 : i32, i32
  }
  func.func @transform_7(%arg0: i32) -> (i32, i32) {
    %c0_i32 = arith.constant 0 : i32
    %c0_i32_0 = arith.constant 0 : i32
    %c0_i32_1 = arith.constant 0 : i32
    return %c0_i32, %c0_i32_0 : i32, i32
  }
  func.func @transform_8(%arg0: i32) -> (i32, i32) {
    %c0_i32 = arith.constant 0 : i32
    %c0_i32_0 = arith.constant 0 : i32
    %c0_i32_1 = arith.constant 0 : i32
    return %c0_i32, %c0_i32_0 : i32, i32
  }
  func.func @transform_9(%arg0: i32) -> (i32, i32) {
    %c0_i32 = arith.constant 0 : i32
    %c0_i32_0 = arith.constant 0 : i32
    %c0_i32_1 = arith.constant 0 : i32
    return %c0_i32, %c0_i32_0 : i32, i32
  }
  func.func @transform_10(%arg0: i32) -> (i32, i32) {
    %c0_i32 = arith.constant 0 : i32
    %c0_i32_0 = arith.constant 0 : i32
    %c0_i32_1 = arith.constant 0 : i32
    return %c0_i32, %c0_i32_0 : i32, i32
  }
  func.func @transform_11(%arg0: i32) -> (i32, i32, i32) {
    %c0_i32 = arith.constant 0 : i32
    %c0_i32_0 = arith.constant 0 : i32
    %c0_i32_1 = arith.constant 0 : i32
    return %arg0, %c0_i32, %c0_i32_0 : i32, i32, i32
  }
}

</mosaic_0001>

<llo_original>
// kernel: tpu_custom_call.1
$region0: #{tpu_custom_call.1}
  #allocation0 [shape = 'u32[]', space=smem, size = 0x4, offset = 0x4, fixed_abs, tag = 'smem constant byte address 0x4 - core index']
  #allocation1 [shape = 'u32[144,128]{1,0:T(1,128)}', space=vmem, size = 0x12000, scoped, tag = 'internal scratch']
  #allocation2 [shape = 'f32[4,24,256]{2,1,0:T(8,128)}', space=vmem, size = 0x18000, scoped, tag = 'scratch operand']
  %s0 = inlined_call_operand.hbm [shape: f32[4,16,128], index: 0, kind: input, shape index: {}]
  %s1 = inlined_call_operand.hbm [shape: f32[128,128], index: 1, kind: input, shape index: {}]
  %s2 = inlined_call_operand.hbm [shape: f32[1,128], index: 2, kind: input, shape index: {}]
  %s3 = inlined_call_operand.vmem [shape: f32[9,128], index: 3, kind: input, shape index: {}]
  %s4 = inlined_call_operand.hbm [shape: f32[1,128], index: 4, kind: input, shape index: {}]
  %s5 = inlined_call_operand.vmem [shape: f32[256,4], index: 5, kind: input, shape index: {}]
  %s6 = inlined_call_operand.hbm [shape: f32[1,4], index: 6, kind: input, shape index: {}]
  %s7 = inlined_call_operand.vmem [shape: f32[4,256], index: 7, kind: input, shape index: {}]
  %s8 = inlined_call_operand.hbm [shape: f32[1,256], index: 8, kind: input, shape index: {}]
  %s9 = inlined_call_operand.vmem [shape: f32[256,128], index: 9, kind: input, shape index: {}]
  %s10 = inlined_call_operand.vmem [shape: f32[1,128], index: 10, kind: input, shape index: {}]
  %s11 = inlined_call_operand.hbm [shape: f32[4,16,128], index: 11, kind: output, shape index: {}]
  %s12 = sld [smem:[#allocation0]]
  $region78: #{tpu_custom_call.1} parent=0
    _
  %s14 = ssub.s32 1, %s12
  %s15 = scalar_select 0, %s14, %s12
  $region1: #{tpu_custom_call.1} parent=0
    #allocation3 [shape = 'u8[32768]{0}', space=vmem, size = 0x8000, scoped, tag = 'input window, operand 0, single buffered']
    #allocation4 [shape = 's32[1]{0}', space=sflag, size = 0x4, scoped, tag = 'scoped memory for tpu_custom_call.1']
    #allocation5 [shape = 's32[1]{0}', space=sflag, size = 0x4, scoped, tag = 'scoped memory for tpu_custom_call.1']
    #allocation6 [shape = 'u8[65536]{0}', space=vmem, size = 0x10000, scoped, tag = 'input window, operand 1, single buffered']
    #allocation7 [shape = 's32[1]{0}', space=sflag, size = 0x4, scoped, tag = 'scoped memory for tpu_custom_call.1']
    #allocation8 [shape = 'u8[512]{0}', space=vmem, size = 0x400, scoped, tag = 'input window, operand 2, single buffered']
    #allocation9 [shape = 'u8[512]{0}', space=vmem, size = 0x400, scoped, tag = 'input window, operand 4, single buffered']
    #allocation10 [shape = 's32[1]{0}', space=sflag, size = 0x4, scoped, tag = 'scoped memory for tpu_custom_call.1']
    #allocation11 [shape = 'u8[512]{0}', space=vmem, size = 0x400, scoped, tag = 'input window, operand 6, single buffered']
    #allocation12 [shape = 'u8[1024]{0}', space=vmem, size = 0x400, scoped, tag = 'input window, operand 8, single buffered']
    #allocation13 [shape = 's32[1]{0}', space=sflag, size = 0x4, scoped, tag = 'scoped memory for tpu_custom_call.1']
    #allocation14 [shape = 'u8[32768]{0}', space=vmem, size = 0x8000, scoped, tag = 'output window, operand 0, single buffered']
    %16 = vsyncpa [#allocation4], 0
    %17 = vsyncpa [#allocation7], 0
    %18 = vsyncpa [#allocation10], 0
    %19 = vsyncpa [#allocation13], 0
    %20 = vsyncpa [#allocation5], 0
    // Predicated region
    $region2: #{tpu_custom_call.1} parent=1 // pred_check
      _
    $region3: #{tpu_custom_call.1} parent=1 // pred_check_branch
      %22 = sbr.rel (0) target = $region5
    $region4: #{tpu_custom_call.1} parent=1 // pred_region
      %s24 = ssub.s32 1024, 1024
      %25 = vsyncadd [#allocation4], %s24
      %s26 = sshll.u32 [#allocation3], 4
      %s27 = int_to_ptr.vmem [resolvable:$true] %s26
      %32 = dma.hbm_to_vmem [thread:$0]  %s0, 1024, %s27, [#allocation4], 128, 128, 8
    $region5: #{tpu_custom_call.1} parent=1 // pred_fallthru
      _
    // Predicated region
    $region6: #{tpu_custom_call.1} parent=1 // pred_check
      _
    $region7: #{tpu_custom_call.1} parent=1 // pred_check_branch
      %34 = sbr.rel (0) target = $region9
    $region8: #{tpu_custom_call.1} parent=1 // pred_region
      %s36 = ssub.s32 2048, 2048
      %37 = vsyncadd [#allocation7], %s36
      %s38 = sshll.u32 [#allocation6], 4
      %s39 = int_to_ptr.vmem [resolvable:$true] %s38
      %44 = dma.hbm_to_vmem [thread:$0]  %s1, 2048, %s39, [#allocation7], 128, 128, 8
    $region9: #{tpu_custom_call.1} parent=1 // pred_fallthru
      _
    // Predicated region
    $region10: #{tpu_custom_call.1} parent=1 // pred_check
      _
    $region11: #{tpu_custom_call.1} parent=1 // pred_check_branch
      %46 = sbr.rel (0) target = $region13
    $region12: #{tpu_custom_call.1} parent=1 // pred_region
      %s48 = ssub.s32 16, 16
      %49 = vsyncadd [#allocation7], %s48
      %s51 = sshll.u32 [#allocation8], 4
      %s52 = int_to_ptr.vmem [resolvable:$true] %s51
      %54 = dma.hbm_to_vmem [thread:$0]  %s2, 16, %s52, [#allocation7]
    $region13: #{tpu_custom_call.1} parent=1 // pred_fallthru
      _
    // Predicated region
    $region14: #{tpu_custom_call.1} parent=1 // pred_check
      _
    $region15: #{tpu_custom_call.1} parent=1 // pred_check_branch
      %56 = sbr.rel (0) target = $region17
    $region16: #{tpu_custom_call.1} parent=1 // pred_region
      _
    $region17: #{tpu_custom_call.1} parent=1 // pred_fallthru
      _
    // Predicated region
    $region18: #{tpu_custom_call.1} parent=1 // pred_check
      _
    $region19: #{tpu_custom_call.1} parent=1 // pred_check_branch
      %58 = sbr.rel (0) target = $region21
    $region20: #{tpu_custom_call.1} parent=1 // pred_region
      %s60 = ssub.s32 16, 16
      %61 = vsyncadd [#allocation10], %s60
      %s63 = sshll.u32 [#allocation9], 4
      %s64 = int_to_ptr.vmem [resolvable:$true] %s63
      %66 = dma.hbm_to_vmem [thread:$0]  %s4, 16, %s64, [#allocation10]
    $region21: #{tpu_custom_call.1} parent=1 // pred_fallthru
      _
    // Predicated region
    $region22: #{tpu_custom_call.1} parent=1 // pred_check
      _
    $region23: #{tpu_custom_call.1} parent=1 // pred_check_branch
      %68 = sbr.rel (0) target = $region25
    $region24: #{tpu_custom_call.1} parent=1 // pred_region
      _
    $region25: #{tpu_custom_call.1} parent=1 // pred_fallthru
      _
    // Predicated region
    $region26: #{tpu_custom_call.1} parent=1 // pred_check
      _
    $region27: #{tpu_custom_call.1} parent=1 // pred_check_branch
      %70 = sbr.rel (0) target = $region29
    $region28: #{tpu_custom_call.1} parent=1 // pred_region
      %s72 = ssub.s32 16, 16
      %73 = vsyncadd [#allocation10], %s72
      %s75 = sshll.u32 [#allocation11], 4
      %s76 = int_to_ptr.vmem [resolvable:$true] %s75
      %78 = dma.hbm_to_vmem [thread:$0]  %s6, 16, %s76, [#allocation10]
    $region29: #{tpu_custom_call.1} parent=1 // pred_fallthru
      _
    // Predicated region
    $region30: #{tpu_custom_call.1} parent=1 // pred_check
      _
    $region31: #{tpu_custom_call.1} parent=1 // pred_check_branch
      %80 = sbr.rel (0) target = $region33
    $region32: #{tpu_custom_call.1} parent=1 // pred_region
      _
    $region33: #{tpu_custom_call.1} parent=1 // pred_fallthru
      _
    // Predicated region
    $region34: #{tpu_custom_call.1} parent=1 // pred_check
      _
    $region35: #{tpu_custom_call.1} parent=1 // pred_check_branch
      %82 = sbr.rel (0) target = $region37
    $region36: #{tpu_custom_call.1} parent=1 // pred_region
      %s84 = ssub.s32 32, 32
      %85 = vsyncadd [#allocation13], %s84
      %s87 = sshll.u32 [#allocation12], 4
      %s88 = int_to_ptr.vmem [resolvable:$true] %s87
      %90 = dma.hbm_to_vmem [thread:$0]  %s8, 32, %s88, [#allocation13]
    $region37: #{tpu_custom_call.1} parent=1 // pred_fallthru
      _
    // Predicated region
    $region38: #{tpu_custom_call.1} parent=1 // pred_check
      _
    $region39: #{tpu_custom_call.1} parent=1 // pred_check_branch
      %92 = sbr.rel (0) target = $region41
    $region40: #{tpu_custom_call.1} parent=1 // pred_region
      _
    $region41: #{tpu_custom_call.1} parent=1 // pred_fallthru
      _
    // Predicated region
    $region42: #{tpu_custom_call.1} parent=1 // pred_check
      _
    $region43: #{tpu_custom_call.1} parent=1 // pred_check_branch
      %94 = sbr.rel (0) target = $region45
    $region44: #{tpu_custom_call.1} parent=1 // pred_region
      _
    $region45: #{tpu_custom_call.1} parent=1 // pred_fallthru
      _
    // Predicated region
    $region46: #{tpu_custom_call.1} parent=1 // pred_check
      _
    $region47: #{tpu_custom_call.1} parent=1 // pred_check_branch
      %96 = sbr.rel (0) target = $region49
    $region48: #{tpu_custom_call.1} parent=1 // pred_region
      %97 = dma.done [#allocation4], 1024
    $region49: #{tpu_custom_call.1} parent=1 // pred_fallthru
      _
    // Predicated region
    $region50: #{tpu_custom_call.1} parent=1 // pred_check
      _
    $region51: #{tpu_custom_call.1} parent=1 // pred_check_branch
      %99 = sbr.rel (0) target = $region53
    $region52: #{tpu_custom_call.1} parent=1 // pred_region
      %100 = dma.done [#allocation7], 2048
    $region53: #{tpu_custom_call.1} parent=1 // pred_fallthru
      _
    // Predicated region
    $region54: #{tpu_custom_call.1} parent=1 // pred_check
      _
    $region55: #{tpu_custom_call.1} parent=1 // pred_check_branch
      %102 = sbr.rel (0) target = $region57
    $region56: #{tpu_custom_call.1} parent=1 // pred_region
      %103 = dma.done [#allocation7], 16
    $region57: #{tpu_custom_call.1} parent=1 // pred_fallthru
      _
    // Predicated region
    $region58: #{tpu_custom_call.1} parent=1 // pred_check
      _
    $region59: #{tpu_custom_call.1} parent=1 // pred_check_branch
      %105 = sbr.rel (0) target = $region61
    $region60: #{tpu_custom_call.1} parent=1 // pred_region
      %106 = dma.done [#allocation10], 16
    $region61: #{tpu_custom_call.1} parent=1 // pred_fallthru
      _
    // Predicated region
    $region62: #{tpu_custom_call.1} parent=1 // pred_check
      _
    $region63: #{tpu_custom_call.1} parent=1 // pred_check_branch
      %108 = sbr.rel (0) target = $region65
    $region64: #{tpu_custom_call.1} parent=1 // pred_region
      %109 = dma.done [#allocation10], 16
    $region65: #{tpu_custom_call.1} parent=1 // pred_fallthru
      _
    // Predicated region
    $region66: #{tpu_custom_call.1} parent=1 // pred_check
      _
    $region67: #{tpu_custom_call.1} parent=1 // pred_check_branch
      %111 = sbr.rel (0) target = $region69
    $region68: #{tpu_custom_call.1} parent=1 // pred_region
      %112 = dma.done [#allocation13], 32
    $region69: #{tpu_custom_call.1} parent=1 // pred_fallthru
      _
    %v113 = vld [vmem:[#allocation3] sm:$0xff]
    %v114 = vld [vmem:[#allocation3 + $0x8] sm:$0xff]
    %v115 = vld [vmem:[#allocation3 + $0x10] sm:$0xff]
    %v116 = vld [vmem:[#allocation3 + $0x18] sm:$0xff]
    %v117 = vld [vmem:[#allocation3 + $0x20] sm:$0xff]
    %v118 = vld [vmem:[#allocation3 + $0x28] sm:$0xff]
    %v119 = vld [vmem:[#allocation3 + $0x30] sm:$0xff]
    %v120 = vld [vmem:[#allocation3 + $0x38] sm:$0xff]
    %v121 = vld [vmem:[#allocation6] sm:$0xff]
    %v122 = vld [vmem:[#allocation6 + $0x8] sm:$0xff]
    %v123 = vld [vmem:[#allocation6 + $0x10] sm:$0xff]
    %v124 = vld [vmem:[#allocation6 + $0x18] sm:$0xff]
    %v125 = vld [vmem:[#allocation6 + $0x20] sm:$0xff]
    %v126 = vld [vmem:[#allocation6 + $0x28] sm:$0xff]
    %v127 = vld [vmem:[#allocation6 + $0x30] sm:$0xff]
    %v128 = vld [vmem:[#allocation6 + $0x38] sm:$0xff]
    %v129 = vld [vmem:[#allocation6 + $0x40] sm:$0xff]
    %v130 = vld [vmem:[#allocation6 + $0x48] sm:$0xff]
    %v131 = vld [vmem:[#allocation6 + $0x50] sm:$0xff]
    %v132 = vld [vmem:[#allocation6 + $0x58] sm:$0xff]
    %v133 = vld [vmem:[#allocation6 + $0x60] sm:$0xff]
    %v134 = vld [vmem:[#allocation6 + $0x68] sm:$0xff]
    %v135 = vld [vmem:[#allocation6 + $0x70] sm:$0xff]
    %v136 = vld [vmem:[#allocation6 + $0x78] sm:$0xff]
    %v137 = vld [vmem:[#allocation8] sm:$0x1]
    %v139 = vlaneseq
    %v140 = vshrl.u32 %v139, 7
    %v141 = vsub.s32 0, %v140
    %v142 = vrot.slane %v137, %v141
    %144 = vmatprep.subr.mxu0 0.0
    %145 = vmatpush1.msra.mxu0 %v136
    %146 = vmatprep.subr.mxu0 0.0
    %147 = vmatpush1.msra.mxu0 %v135
    %148 = vmatprep.subr.mxu0 0.0
    %149 = vmatpush1.msra.mxu0 %v134
    %150 = vmatprep.subr.mxu0 0.0
    %151 = vmatpush1.msra.mxu0 %v133
    %152 = vmatprep.subr.mxu0 0.0
    %153 = vmatpush1.msra.mxu0 %v132
    %154 = vmatprep.subr.mxu0 0.0
    %155 = vmatpush1.msra.mxu0 %v131
    %156 = vmatprep.subr.mxu0 0.0
    %157 = vmatpush1.msra.mxu0 %v130
    %158 = vmatprep.subr.mxu0 0.0
    %159 = vmatpush1.msra.mxu0 %v129
    %160 = vmatprep.subr.mxu0 0.0
    %161 = vmatpush1.msra.mxu0 %v128
    %162 = vmatprep.subr.mxu0 0.0
    %163 = vmatpush1.msra.mxu0 %v127
    %164 = vmatprep.subr.mxu0 0.0
    %165 = vmatpush1.msra.mxu0 %v126
    %166 = vmatprep.subr.mxu0 0.0
    %167 = vmatpush1.msra.mxu0 %v125
    %168 = vmatprep.subr.mxu0 0.0
    %169 = vmatpush1.msra.mxu0 %v124
    %170 = vmatprep.subr.mxu0 0.0
    %171 = vmatpush1.msra.mxu0 %v123
    %172 = vmatprep.subr.mxu0 0.0
    %173 = vmatpush1.msra.mxu0 %v122
    %174 = vmatprep.subr.mxu0 0.0
    %175 = vmatpush1.msra.mxu0 %v121
    %176 = vmatprep.subr.mxu0 0.0
    %177 = vmatpush2.msra.mxu0 0.0
    %178 = vmatprep.subr.mxu0 0.0
    %179 = vmatpush2.msra.mxu0 0.0
    %180 = vmatprep.subr.mxu0 0.0
    %181 = vmatpush2.msra.mxu0 0.0
    %182 = vmatprep.subr.mxu0 0.0
    %183 = vmatpush2.msra.mxu0 0.0
    %184 = vmatprep.subr.mxu0 0.0
    %185 = vmatpush2.msra.mxu0 0.0
    %186 = vmatprep.subr.mxu0 0.0
    %187 = vmatpush2.msra.mxu0 0.0
    %188 = vmatprep.subr.mxu0 0.0
    %189 = vmatpush2.msra.mxu0 0.0
    %190 = vmatprep.subr.mxu0 0.0
    %191 = vmatpush2.msra.mxu0 0.0
    %192 = vmatprep.subr.mxu0 0.0
    %193 = vmatpush2.msra.mxu0 0.0
    %194 = vmatprep.subr.mxu0 0.0
    %195 = vmatpush2.msra.mxu0 0.0
    %196 = vmatprep.subr.mxu0 0.0
    %197 = vmatpush2.msra.mxu0 0.0
    %198 = vmatprep.subr.mxu0 0.0
    %199 = vmatpush2.msra.mxu0 0.0
    %200 = vmatprep.subr.mxu0 0.0
    %201 = vmatpush2.msra.mxu0 0.0
    %202 = vmatprep.subr.mxu0 0.0
    %203 = vmatpush2.msra.mxu0 0.0
    %204 = vmatprep.subr.mxu0 0.0
    %205 = vmatpush2.msra.mxu0 0.0
    %206 = vmatprep.subr.mxu0 0.0
    %207 = vmatpush2.msra.mxu0 0.0
    %208 = vmatprep.mubr.f32.mxu0 0.0
    %209 = vmatmul.mubr.f32.gmra.mxu0 %v113
    %v210 = vpop.f32.mrf.mxu0
    %v211 = vadd.f32 %v142, %v210
    %v212 = vpop.f32.mrf.mxu0
    %213 = vmatprep.mubr.f32.mxu0 0.0
    %214 = vmatmul.mubr.f32.gmra.mxu0 %v114
    %v215 = vpop.f32.mrf.mxu0
    %v216 = vadd.f32 %v142, %v215
    %v217 = vpop.f32.mrf.mxu0
    %218 = vmatprep.mubr.f32.mxu0 0.0
    %219 = vmatmul.mubr.f32.gmra.mxu0 %v115
    %v220 = vpop.f32.mrf.mxu0
    %v221 = vadd.f32 %v142, %v220
    %v222 = vpop.f32.mrf.mxu0
    %223 = vmatprep.mubr.f32.mxu0 0.0
    %224 = vmatmul.mubr.f32.gmra.mxu0 %v116
    %v225 = vpop.f32.mrf.mxu0
    %v226 = vadd.f32 %v142, %v225
    %v227 = vpop.f32.mrf.mxu0
    %228 = vmatprep.mubr.f32.mxu0 0.0
    %229 = vmatmul.mubr.f32.gmra.mxu0 %v117
    %v230 = vpop.f32.mrf.mxu0
    %v231 = vadd.f32 %v142, %v230
    %v232 = vpop.f32.mrf.mxu0
    %233 = vmatprep.mubr.f32.mxu0 0.0
    %234 = vmatmul.mubr.f32.gmra.mxu0 %v118
    %v235 = vpop.f32.mrf.mxu0
    %v236 = vadd.f32 %v142, %v235
    %v237 = vpop.f32.mrf.mxu0
    %238 = vmatprep.mubr.f32.mxu0 0.0
    %239 = vmatmul.mubr.f32.gmra.mxu0 %v119
    %v240 = vpop.f32.mrf.mxu0
    %v241 = vadd.f32 %v142, %v240
    %v242 = vpop.f32.mrf.mxu0
    %243 = vmatprep.mubr.f32.mxu0 0.0
    %244 = vmatmul.mubr.f32.gmra.mxu0 %v120
    %v245 = vpop.f32.mrf.mxu0
    %v246 = vadd.f32 %v142, %v245
    %v247 = vpop.f32.mrf.mxu0
    %248 = vdwg.mxu0
    %v249 = vmax.f32 %v211, 0.0
    %v250 = vmax.f32 %v216, 0.0
    %v251 = vmax.f32 %v221, 0.0
    %v252 = vmax.f32 %v226, 0.0
    %v253 = vmax.f32 %v231, 0.0
    %v254 = vmax.f32 %v236, 0.0
    %v255 = vmax.f32 %v241, 0.0
    %v256 = vmax.f32 %v246, 0.0
    %257 = vst [vmem:[#allocation2] sm:$0xff] %v249
    %258 = vst [vmem:[#allocation2 + $0x10] sm:$0xff] %v250
    %259 = vst [vmem:[#allocation2 + $0x30] sm:$0xff] %v251
    %260 = vst [vmem:[#allocation2 + $0x40] sm:$0xff] %v252
    %261 = vst [vmem:[#allocation2 + $0x60] sm:$0xff] %v253
    %262 = vst [vmem:[#allocation2 + $0x70] sm:$0xff] %v254
    %263 = vst [vmem:[#allocation2 + $0x90] sm:$0xff] %v255
    %264 = vst [vmem:[#allocation2 + $0xa0] sm:$0xff] %v256
    %265 = vst [vmem:[#allocation2 + $0x20] sm:$0xff] 0.0
    %266 = vst [vmem:[#allocation2 + $0x28] sm:$0xff] 0.0
    %267 = vst [vmem:[#allocation2 + $0x50] sm:$0xff] 0.0
    %268 = vst [vmem:[#allocation2 + $0x58] sm:$0xff] 0.0
    %269 = vst [vmem:[#allocation2 + $0x80] sm:$0xff] 0.0
    %270 = vst [vmem:[#allocation2 + $0x88] sm:$0xff] 0.0
    %271 = vst [vmem:[#allocation2 + $0xb0] sm:$0xff] 0.0
    %272 = vst [vmem:[#allocation2 + $0xb8] sm:$0xff] 0.0
    %273 = vst [vmem:[#allocation2 + $0x8] sm:$0xff] 0.0
    %274 = vst [vmem:[#allocation2 + $0x18] sm:$0xff] 0.0
    %275 = vst [vmem:[#allocation2 + $0x38] sm:$0xff] 0.0
    %276 = vst [vmem:[#allocation2 + $0x48] sm:$0xff] 0.0
    %277 = vst [vmem:[#allocation2 + $0x68] sm:$0xff] 0.0
    %278 = vst [vmem:[#allocation2 + $0x78] sm:$0xff] 0.0
    %279 = vst [vmem:[#allocation2 + $0x98] sm:$0xff] 0.0
    %280 = vst [vmem:[#allocation2 + $0xa8] sm:$0xff] 0.0
    %v281 = vld [vmem:[#allocation2] sm:$0xff]
    %v282 = vld [vmem:[#allocation2 + $0x8] sm:$0xff]
    %v283 = vld [vmem:[#allocation2 + $0x10] sm:$0xff]
    %v284 = vld [vmem:[#allocation2 + $0x18] sm:$0xff]
    %v285 = vld [vmem:[#allocation2 + $0x20] sm:$0xff]
    %v286 = vld [vmem:[#allocation2 + $0x28] sm:$0xff]
    %v287 = vld [vmem:[#allocation2 + $0x30] sm:$0xff]
    %v288 = vld [vmem:[#allocation2 + $0x38] sm:$0xff]
    %v289 = vld [vmem:[#allocation2 + $0x40] sm:$0xff]
    %v290 = vld [vmem:[#allocation2 + $0x48] sm:$0xff]
    %v291 = vld [vmem:[#allocation2 + $0x50] sm:$0xff]
    %v292 = vld [vmem:[#allocation2 + $0x58] sm:$0xff]
    %v293 = vld [vmem:[#allocation2 + $0x60] sm:$0xff]
    %v294 = vld [vmem:[#allocation2 + $0x68] sm:$0xff]
    %v295 = vld [vmem:[#allocation2 + $0x70] sm:$0xff]
    %v296 = vld [vmem:[#allocation2 + $0x78] sm:$0xff]
    %v297 = vld [vmem:[#allocation2 + $0x80] sm:$0xff]
    %v298 = vld [vmem:[#allocation2 + $0x88] sm:$0xff]
    %v299 = vld [vmem:[#allocation2 + $0x90] sm:$0xff]
    %v300 = vld [vmem:[#allocation2 + $0x98] sm:$0xff]
    %v301 = vld [vmem:[#allocation2 + $0xa0] sm:$0xff]
    %v302 = vld [vmem:[#allocation2 + $0xa8] sm:$0xff]
    %v303 = vld [vmem:[#allocation2 + $0xb0] sm:$0xff]
    %v304 = vld [vmem:[#allocation2 + $0xb8] sm:$0xff]
    %v305 = vld [vmem:[%s3] sm:$0xff]
    %v306 = vld [vmem:[%s3 + $0x8] sm:$0x1]
    %v307 = vld [vmem:[#allocation9] sm:$0x1]
    %v309 = vlaneseq
    %v310 = vshrl.u32 %v309, 7
    %v311 = vsub.s32 0, %v310
    %v312 = vrot.slane %v307, %v311
    %v314 = vrot.slane %v281, 7
    %v315 = vrot.slane %v282, 7
    %v316 = vrot.slane %v287, 7
    %v317 = vrot.slane %v288, 7
    %v318 = vrot.slane %v293, 7
    %v319 = vrot.slane %v294, 7
    %v320 = vrot.slane %v299, 7
    %v321 = vrot.slane %v300, 7
    %v322 = vrot.slane %v283, 7
    %v323 = vrot.slane %v284, 7
    %v324 = vrot.slane %v289, 7
    %v325 = vrot.slane %v290, 7
    %v326 = vrot.slane %v295, 7
    %v327 = vrot.slane %v296, 7
    %v328 = vrot.slane %v301, 7
    %v329 = vrot.slane %v302, 7
    %v330 = vrot.slane %v285, 7
    %v331 = vrot.slane %v286, 7
    %v332 = vrot.slane %v291, 7
    %v333 = vrot.slane %v292, 7
    %v334 = vrot.slane %v297, 7
    %v335 = vrot.slane %v298, 7
    %v336 = vrot.slane %v303, 7
    %v337 = vrot.slane %v304, 7
    %v338 = vlaneseq
    %v339 = vshrl.u32 %v338, 7
    %vm340 = vcmp.lt.s32.totalorder %v339, 1
    %v341 = vsel %vm340, %v314, %v322
    %v342 = vsel %vm340, %v315, %v323
    %v343 = vsel %vm340, %v316, %v324
    %v344 = vsel %vm340, %v317, %v325
    %v345 = vsel %vm340, %v318, %v326
    %v346 = vsel %vm340, %v319, %v327
    %v347 = vsel %vm340, %v320, %v328
    %v348 = vsel %vm340, %v321, %v329
    %v349 = vsel %vm340, %v330, %v314
    %v350 = vsel %vm340, %v331, %v315
    %v351 = vsel %vm340, %v332, %v316
    %v352 = vsel %vm340, %v333, %v317
    %v353 = vsel %vm340, %v334, %v318
    %v354 = vsel %vm340, %v335, %v319
    %v355 = vsel %vm340, %v336, %v320
    %v356 = vsel %vm340, %v337, %v321
    %357 = vrot.lane.b32.xlu0 %v349, 8
    %v358 = vpop.permute.xlu0 %357
    %359 = vrot.lane.b32.xlu0 %v341, 8
    %v360 = vpop.permute.xlu0 %359
    %361 = vrot.lane.b32.xlu0 %v351, 8
    %v362 = vpop.permute.xlu0 %361
    %363 = vrot.lane.b32.xlu0 %v343, 8
    %v364 = vpop.permute.xlu0 %363
    %365 = vrot.lane.b32.xlu0 %v353, 8
    %v366 = vpop.permute.xlu0 %365
    %367 = vrot.lane.b32.xlu0 %v345, 8
    %v368 = vpop.permute.xlu0 %367
    %369 = vrot.lane.b32.xlu0 %v355, 8
    %v370 = vpop.permute.xlu0 %369
    %371 = vrot.lane.b32.xlu0 %v347, 8
    %v372 = vpop.permute.xlu0 %371
    %373 = vrot.lane.b32.xlu0 %v350, 8
    %v374 = vpop.permute.xlu0 %373
    %375 = vrot.lane.b32.xlu0 %v342, 8
    %v376 = vpop.permute.xlu0 %375
    %377 = vrot.lane.b32.xlu0 %v352, 8
    %v378 = vpop.permute.xlu0 %377
    %379 = vrot.lane.b32.xlu0 %v344, 8
    %v380 = vpop.permute.xlu0 %379
    %381 = vrot.lane.b32.xlu0 %v354, 8
    %v382 = vpop.permute.xlu0 %381
    %383 = vrot.lane.b32.xlu0 %v346, 8
    %v384 = vpop.permute.xlu0 %383
    %385 = vrot.lane.b32.xlu0 %v356, 8
    %v386 = vpop.permute.xlu0 %385
    %387 = vrot.lane.b32.xlu0 %v348, 8
    %v388 = vpop.permute.xlu0 %387
    %v389 = vlaneseq
    %v390 = vand.u32 %v389, 127
    %vm391 = vcmp.lt.s32.totalorder %v390, 8
    %v392 = vsel %vm391, %v374, %v358
    %v393 = vsel %vm391, %v376, %v360
    %v394 = vsel %vm391, %v378, %v362
    %v395 = vsel %vm391, %v380, %v364
    %v396 = vsel %vm391, %v382, %v366
    %v397 = vsel %vm391, %v384, %v368
    %v398 = vsel %vm391, %v386, %v370
    %v399 = vsel %vm391, %v388, %v372
    %v400 = vlaneseq
    %v401 = vshrl.u32 %v400, 7
    %v402 = vsub.s32 0, %v401
    %v403 = vrot.slane %v305, %v402
    %v404 = vmul.f32 %v392, %v403
    %v405 = vmul.f32 %v393, %v403
    %v406 = vmul.f32 %v394, %v403
    %v407 = vmul.f32 %v395, %v403
    %v408 = vmul.f32 %v396, %v403
    %v409 = vmul.f32 %v397, %v403
    %v410 = vmul.f32 %v398, %v403
    %v411 = vmul.f32 %v399, %v403
    %v412 = vadd.f32 %v312, %v404
    %v413 = vadd.f32 %v312, %v405
    %v414 = vadd.f32 %v312, %v406
    %v415 = vadd.f32 %v312, %v407
    %v416 = vadd.f32 %v312, %v408
    %v417 = vadd.f32 %v312, %v409
    %v418 = vadd.f32 %v312, %v410
    %v419 = vadd.f32 %v312, %v411
    %v420 = vlaneseq
    %v421 = vshrl.u32 %v420, 7
    %v422 = vsub.s32 1, %v421
    %v423 = vrot.slane %v305, %v422
    %v424 = vmul.f32 %v349, %v423
    %v425 = vmul.f32 %v341, %v423
    %v426 = vmul.f32 %v351, %v423
    %v427 = vmul.f32 %v343, %v423
    %v428 = vmul.f32 %v353, %v423
    %v429 = vmul.f32 %v345, %v423
    %v430 = vmul.f32 %v355, %v423
    %v431 = vmul.f32 %v347, %v423
    %v432 = vadd.f32 %v412, %v424
    %v433 = vadd.f32 %v413, %v425
    %v434 = vadd.f32 %v414, %v426
    %v435 = vadd.f32 %v415, %v427
    %v436 = vadd.f32 %v416, %v428
    %v437 = vadd.f32 %v417, %v429
    %v438 = vadd.f32 %v418, %v430
    %v439 = vadd.f32 %v419, %v431
    %440 = vrot.lane.b32.xlu0 %v349, 120
    %v441 = vpop.permute.xlu0 %440
    %442 = vrot.lane.b32.xlu0 %v341, 120
    %v443 = vpop.permute.xlu0 %442
    %444 = vrot.lane.b32.xlu0 %v351, 120
    %v445 = vpop.permute.xlu0 %444
    %446 = vrot.lane.b32.xlu0 %v343, 120
    %v447 = vpop.permute.xlu0 %446
    %448 = vrot.lane.b32.xlu0 %v353, 120
    %v449 = vpop.permute.xlu0 %448
    %450 = vrot.lane.b32.xlu0 %v345, 120
    %v451 = vpop.permute.xlu0 %450
    %452 = vrot.lane.b32.xlu0 %v355, 120
    %v453 = vpop.permute.xlu0 %452
    %454 = vrot.lane.b32.xlu0 %v347, 120
    %v455 = vpop.permute.xlu0 %454
    %456 = vrot.lane.b32.xlu0 %v350, 120
    %v457 = vpop.permute.xlu0 %456
    %458 = vrot.lane.b32.xlu0 %v342, 120
    %v459 = vpop.permute.xlu0 %458
    %460 = vrot.lane.b32.xlu0 %v352, 120
    %v461 = vpop.permute.xlu0 %460
    %462 = vrot.lane.b32.xlu0 %v344, 120
    %v463 = vpop.permute.xlu0 %462
    %464 = vrot.lane.b32.xlu0 %v354, 120
    %v465 = vpop.permute.xlu0 %464
    %466 = vrot.lane.b32.xlu0 %v346, 120
    %v467 = vpop.permute.xlu0 %466
    %468 = vrot.lane.b32.xlu0 %v356, 120
    %v469 = vpop.permute.xlu0 %468
    %470 = vrot.lane.b32.xlu0 %v348, 120
    %v471 = vpop.permute.xlu0 %470
    %vm472 = vcmp.lt.s32.totalorder %v390, 120
    %v473 = vsel %vm472, %v441, %v457
    %v474 = vsel %vm472, %v443, %v459
    %v475 = vsel %vm472, %v445, %v461
    %v476 = vsel %vm472, %v447, %v463
    %v477 = vsel %vm472, %v449, %v465
    %v478 = vsel %vm472, %v451, %v467
    %v479 = vsel %vm472, %v453, %v469
    %v480 = vsel %vm472, %v455, %v471
    %v481 = vlaneseq
    %v482 = vshrl.u32 %v481, 7
    %v483 = vsub.s32 2, %v482
    %v484 = vrot.slane %v305, %v483
    %v485 = vmul.f32 %v473, %v484
    %v486 = vmul.f32 %v474, %v484
    %v487 = vmul.f32 %v475, %v484
    %v488 = vmul.f32 %v476, %v484
    %v489 = vmul.f32 %v477, %v484
    %v490 = vmul.f32 %v478, %v484
    %v491 = vmul.f32 %v479, %v484
    %v492 = vmul.f32 %v480, %v484
    %v493 = vadd.f32 %v432, %v485
    %v494 = vadd.f32 %v433, %v486
    %v495 = vadd.f32 %v434, %v487
    %v496 = vadd.f32 %v435, %v488
    %v497 = vadd.f32 %v436, %v489
    %v498 = vadd.f32 %v437, %v490
    %v499 = vadd.f32 %v438, %v491
    %v500 = vadd.f32 %v439, %v492
    %501 = vrot.lane.b32.xlu0 %v281, 8
    %v502 = vpop.permute.xlu0 %501
    %503 = vrot.lane.b32.xlu0 %v283, 8
    %v504 = vpop.permute.xlu0 %503
    %505 = vrot.lane.b32.xlu0 %v287, 8
    %v506 = vpop.permute.xlu0 %505
    %507 = vrot.lane.b32.xlu0 %v289, 8
    %v508 = vpop.permute.xlu0 %507
    %509 = vrot.lane.b32.xlu0 %v293, 8
    %v510 = vpop.permute.xlu0 %509
    %511 = vrot.lane.b32.xlu0 %v295, 8
    %v512 = vpop.permute.xlu0 %511
    %513 = vrot.lane.b32.xlu0 %v299, 8
    %v514 = vpop.permute.xlu0 %513
    %515 = vrot.lane.b32.xlu0 %v301, 8
    %v516 = vpop.permute.xlu0 %515
    %517 = vrot.lane.b32.xlu0 %v282, 8
    %v518 = vpop.permute.xlu0 %517
    %519 = vrot.lane.b32.xlu0 %v284, 8
    %v520 = vpop.permute.xlu0 %519
    %521 = vrot.lane.b32.xlu0 %v288, 8
    %v522 = vpop.permute.xlu0 %521
    %523 = vrot.lane.b32.xlu0 %v290, 8
    %v524 = vpop.permute.xlu0 %523
    %525 = vrot.lane.b32.xlu0 %v294, 8
    %v526 = vpop.permute.xlu0 %525
    %527 = vrot.lane.b32.xlu0 %v296, 8
    %v528 = vpop.permute.xlu0 %527
    %529 = vrot.lane.b32.xlu0 %v300, 8
    %v530 = vpop.permute.xlu0 %529
    %531 = vrot.lane.b32.xlu0 %v302, 8
    %v532 = vpop.permute.xlu0 %531
    %v533 = vsel %vm391, %v518, %v502
    %v534 = vsel %vm391, %v520, %v504
    %v535 = vsel %vm391, %v522, %v506
    %v536 = vsel %vm391, %v524, %v508
    %v537 = vsel %vm391, %v526, %v510
    %v538 = vsel %vm391, %v528, %v512
    %v539 = vsel %vm391, %v530, %v514
    %v540 = vsel %vm391, %v532, %v516
    %v541 = vlaneseq
    %v542 = vshrl.u32 %v541, 7
    %v543 = vsub.s32 3, %v542
    %v544 = vrot.slane %v305, %v543
    %v545 = vmul.f32 %v533, %v544
    %v546 = vmul.f32 %v534, %v544
    %v547 = vmul.f32 %v535, %v544
    %v548 = vmul.f32 %v536, %v544
    %v549 = vmul.f32 %v537, %v544
    %v550 = vmul.f32 %v538, %v544
    %v551 = vmul.f32 %v539, %v544
    %v552 = vmul.f32 %v540, %v544
    %v553 = vadd.f32 %v493, %v545
    %v554 = vadd.f32 %v494, %v546
    %v555 = vadd.f32 %v495, %v547
    %v556 = vadd.f32 %v496, %v548
    %v557 = vadd.f32 %v497, %v549
    %v558 = vadd.f32 %v498, %v550
    %v559 = vadd.f32 %v499, %v551
    %v560 = vadd.f32 %v500, %v552
    %v561 = vlaneseq
    %v562 = vshrl.u32 %v561, 7
    %v563 = vsub.s32 4, %v562
    %v564 = vrot.slane %v305, %v563
    %v565 = vmul.f32 %v281, %v564
    %v566 = vmul.f32 %v283, %v564
    %v567 = vmul.f32 %v287, %v564
    %v568 = vmul.f32 %v289, %v564
    %v569 = vmul.f32 %v293, %v564
    %v570 = vmul.f32 %v295, %v564
    %v571 = vmul.f32 %v299, %v564
    %v572 = vmul.f32 %v301, %v564
    %v573 = vadd.f32 %v553, %v565
    %v574 = vadd.f32 %v554, %v566
    %v575 = vadd.f32 %v555, %v567
    %v576 = vadd.f32 %v556, %v568
    %v577 = vadd.f32 %v557, %v569
    %v578 = vadd.f32 %v558, %v570
    %v579 = vadd.f32 %v559, %v571
    %v580 = vadd.f32 %v560, %v572
    %581 = vrot.lane.b32.xlu0 %v281, 120
    %v582 = vpop.permute.xlu0 %581
    %583 = vrot.lane.b32.xlu0 %v283, 120
    %v584 = vpop.permute.xlu0 %583
    %585 = vrot.lane.b32.xlu0 %v287, 120
    %v586 = vpop.permute.xlu0 %585
    %587 = vrot.lane.b32.xlu0 %v289, 120
    %v588 = vpop.permute.xlu0 %587
    %589 = vrot.lane.b32.xlu0 %v293, 120
    %v590 = vpop.permute.xlu0 %589
    %591 = vrot.lane.b32.xlu0 %v295, 120
    %v592 = vpop.permute.xlu0 %591
    %593 = vrot.lane.b32.xlu0 %v299, 120
    %v594 = vpop.permute.xlu0 %593
    %595 = vrot.lane.b32.xlu0 %v301, 120
    %v596 = vpop.permute.xlu0 %595
    %597 = vrot.lane.b32.xlu0 %v282, 120
    %v598 = vpop.permute.xlu0 %597
    %599 = vrot.lane.b32.xlu0 %v284, 120
    %v600 = vpop.permute.xlu0 %599
    %601 = vrot.lane.b32.xlu0 %v288, 120
    %v602 = vpop.permute.xlu0 %601
    %603 = vrot.lane.b32.xlu0 %v290, 120
    %v604 = vpop.permute.xlu0 %603
    %605 = vrot.lane.b32.xlu0 %v294, 120
    %v606 = vpop.permute.xlu0 %605
    %607 = vrot.lane.b32.xlu0 %v296, 120
    %v608 = vpop.permute.xlu0 %607
    %609 = vrot.lane.b32.xlu0 %v300, 120
    %v610 = vpop.permute.xlu0 %609
    %611 = vrot.lane.b32.xlu0 %v302, 120
    %v612 = vpop.permute.xlu0 %611
    %v613 = vsel %vm472, %v582, %v598
    %v614 = vsel %vm472, %v584, %v600
    %v615 = vsel %vm472, %v586, %v602
    %v616 = vsel %vm472, %v588, %v604
    %v617 = vsel %vm472, %v590, %v606
    %v618 = vsel %vm472, %v592, %v608
    %v619 = vsel %vm472, %v594, %v610
    %v620 = vsel %vm472, %v596, %v612
    %v621 = vlaneseq
    %v622 = vshrl.u32 %v621, 7
    %v623 = vsub.s32 5, %v622
    %v624 = vrot.slane %v305, %v623
    %v625 = vmul.f32 %v613, %v624
    %v626 = vmul.f32 %v614, %v624
    %v627 = vmul.f32 %v615, %v624
    %v628 = vmul.f32 %v616, %v624
    %v629 = vmul.f32 %v617, %v624
    %v630 = vmul.f32 %v618, %v624
    %v631 = vmul.f32 %v619, %v624
    %v632 = vmul.f32 %v620, %v624
    %v633 = vadd.f32 %v573, %v625
    %v634 = vadd.f32 %v574, %v626
    %v635 = vadd.f32 %v575, %v627
    %v636 = vadd.f32 %v576, %v628
    %v637 = vadd.f32 %v577, %v629
    %v638 = vadd.f32 %v578, %v630
    %v639 = vadd.f32 %v579, %v631
    %v640 = vadd.f32 %v580, %v632
    %v641 = vrot.slane %v281, 1
    %v642 = vrot.slane %v282, 1
    %v643 = vrot.slane %v287, 1
    %v644 = vrot.slane %v288, 1
    %v645 = vrot.slane %v293, 1
    %v646 = vrot.slane %v294, 1
    %v647 = vrot.slane %v299, 1
    %v648 = vrot.slane %v300, 1
    %v649 = vrot.slane %v283, 1
    %v650 = vrot.slane %v284, 1
    %v651 = vrot.slane %v289, 1
    %v652 = vrot.slane %v290, 1
    %v653 = vrot.slane %v295, 1
    %v654 = vrot.slane %v296, 1
    %v655 = vrot.slane %v301, 1
    %v656 = vrot.slane %v302, 1
    %v657 = vrot.slane %v285, 1
    %v658 = vrot.slane %v286, 1
    %v659 = vrot.slane %v291, 1
    %v660 = vrot.slane %v292, 1
    %v661 = vrot.slane %v297, 1
    %v662 = vrot.slane %v298, 1
    %v663 = vrot.slane %v303, 1
    %v664 = vrot.slane %v304, 1
    %vm665 = vcmp.lt.s32.totalorder %v339, 7
    %v666 = vsel %vm665, %v649, %v657
    %v667 = vsel %vm665, %v650, %v658
    %v668 = vsel %vm665, %v651, %v659
    %v669 = vsel %vm665, %v652, %v660
    %v670 = vsel %vm665, %v653, %v661
    %v671 = vsel %vm665, %v654, %v662
    %v672 = vsel %vm665, %v655, %v663
    %v673 = vsel %vm665, %v656, %v664
    %v674 = vsel %vm665, %v641, %v649
    %v675 = vsel %vm665, %v642, %v650
    %v676 = vsel %vm665, %v643, %v651
    %v677 = vsel %vm665, %v644, %v652
    %v678 = vsel %vm665, %v645, %v653
    %v679 = vsel %vm665, %v646, %v654
    %v680 = vsel %vm665, %v647, %v655
    %v681 = vsel %vm665, %v648, %v656
    %682 = vrot.lane.b32.xlu0 %v674, 8
    %v683 = vpop.permute.xlu0 %682
    %684 = vrot.lane.b32.xlu0 %v666, 8
    %v685 = vpop.permute.xlu0 %684
    %686 = vrot.lane.b32.xlu0 %v676, 8
    %v687 = vpop.permute.xlu0 %686
    %688 = vrot.lane.b32.xlu0 %v668, 8
    %v689 = vpop.permute.xlu0 %688
    %690 = vrot.lane.b32.xlu0 %v678, 8
    %v691 = vpop.permute.xlu0 %690
    %692 = vrot.lane.b32.xlu0 %v670, 8
    %v693 = vpop.permute.xlu0 %692
    %694 = vrot.lane.b32.xlu0 %v680, 8
    %v695 = vpop.permute.xlu0 %694
    %696 = vrot.lane.b32.xlu0 %v672, 8
    %v697 = vpop.permute.xlu0 %696
    %698 = vrot.lane.b32.xlu0 %v675, 8
    %v699 = vpop.permute.xlu0 %698
    %700 = vrot.lane.b32.xlu0 %v667, 8
    %v701 = vpop.permute.xlu0 %700
    %702 = vrot.lane.b32.xlu0 %v677, 8
    %v703 = vpop.permute.xlu0 %702
    %704 = vrot.lane.b32.xlu0 %v669, 8
    %v705 = vpop.permute.xlu0 %704
    %706 = vrot.lane.b32.xlu0 %v679, 8
    %v707 = vpop.permute.xlu0 %706
    %708 = vrot.lane.b32.xlu0 %v671, 8
    %v709 = vpop.permute.xlu0 %708
    %710 = vrot.lane.b32.xlu0 %v681, 8
    %v711 = vpop.permute.xlu0 %710
    %712 = vrot.lane.b32.xlu0 %v673, 8
    %v713 = vpop.permute.xlu0 %712
    %v714 = vsel %vm391, %v699, %v683
    %v715 = vsel %vm391, %v701, %v685
    %v716 = vsel %vm391, %v703, %v687
    %v717 = vsel %vm391, %v705, %v689
    %v718 = vsel %vm391, %v707, %v691
    %v719 = vsel %vm391, %v709, %v693
    %v720 = vsel %vm391, %v711, %v695
    %v721 = vsel %vm391, %v713, %v697
    %v722 = vlaneseq
    %v723 = vshrl.u32 %v722, 7
    %v724 = vsub.s32 6, %v723
    %v725 = vrot.slane %v305, %v724
    %v726 = vmul.f32 %v714, %v725
    %v727 = vmul.f32 %v715, %v725
    %v728 = vmul.f32 %v716, %v725
    %v729 = vmul.f32 %v717, %v725
    %v730 = vmul.f32 %v718, %v725
    %v731 = vmul.f32 %v719, %v725
    %v732 = vmul.f32 %v720, %v725
    %v733 = vmul.f32 %v721, %v725
    %v734 = vadd.f32 %v633, %v726
    %v735 = vadd.f32 %v634, %v727
    %v736 = vadd.f32 %v635, %v728
    %v737 = vadd.f32 %v636, %v729
    %v738 = vadd.f32 %v637, %v730
    %v739 = vadd.f32 %v638, %v731
    %v740 = vadd.f32 %v639, %v732
    %v741 = vadd.f32 %v640, %v733
    %v742 = vlaneseq
    %v743 = vshrl.u32 %v742, 7
    %v744 = vsub.s32 7, %v743
    %v745 = vrot.slane %v305, %v744
    %v746 = vmul.f32 %v674, %v745
    %v747 = vmul.f32 %v666, %v745
    %v748 = vmul.f32 %v676, %v745
    %v749 = vmul.f32 %v668, %v745
    %v750 = vmul.f32 %v678, %v745
    %v751 = vmul.f32 %v670, %v745
    %v752 = vmul.f32 %v680, %v745
    %v753 = vmul.f32 %v672, %v745
    %v754 = vadd.f32 %v734, %v746
    %v755 = vadd.f32 %v735, %v747
    %v756 = vadd.f32 %v736, %v748
    %v757 = vadd.f32 %v737, %v749
    %v758 = vadd.f32 %v738, %v750
    %v759 = vadd.f32 %v739, %v751
    %v760 = vadd.f32 %v740, %v752
    %v761 = vadd.f32 %v741, %v753
    %762 = vrot.lane.b32.xlu0 %v674, 120
    %v763 = vpop.permute.xlu0 %762
    %764 = vrot.lane.b32.xlu0 %v666, 120
    %v765 = vpop.permute.xlu0 %764
    %766 = vrot.lane.b32.xlu0 %v676, 120
    %v767 = vpop.permute.xlu0 %766
    %768 = vrot.lane.b32.xlu0 %v668, 120
    %v769 = vpop.permute.xlu0 %768
    %770 = vrot.lane.b32.xlu0 %v678, 120
    %v771 = vpop.permute.xlu0 %770
    %772 = vrot.lane.b32.xlu0 %v670, 120
    %v773 = vpop.permute.xlu0 %772
    %774 = vrot.lane.b32.xlu0 %v680, 120
    %v775 = vpop.permute.xlu0 %774
    %776 = vrot.lane.b32.xlu0 %v672, 120
    %v777 = vpop.permute.xlu0 %776
    %778 = vrot.lane.b32.xlu0 %v675, 120
    %v779 = vpop.permute.xlu0 %778
    %780 = vrot.lane.b32.xlu0 %v667, 120
    %v781 = vpop.permute.xlu0 %780
    %782 = vrot.lane.b32.xlu0 %v677, 120
    %v783 = vpop.permute.xlu0 %782
    %784 = vrot.lane.b32.xlu0 %v669, 120
    %v785 = vpop.permute.xlu0 %784
    %786 = vrot.lane.b32.xlu0 %v679, 120
    %v787 = vpop.permute.xlu0 %786
    %788 = vrot.lane.b32.xlu0 %v671, 120
    %v789 = vpop.permute.xlu0 %788
    %790 = vrot.lane.b32.xlu0 %v681, 120
    %v791 = vpop.permute.xlu0 %790
    %792 = vrot.lane.b32.xlu0 %v673, 120
    %v793 = vpop.permute.xlu0 %792
    %v794 = vsel %vm472, %v763, %v779
    %v795 = vsel %vm472, %v765, %v781
    %v796 = vsel %vm472, %v767, %v783
    %v797 = vsel %vm472, %v769, %v785
    %v798 = vsel %vm472, %v771, %v787
    %v799 = vsel %vm472, %v773, %v789
    %v800 = vsel %vm472, %v775, %v791
    %v801 = vsel %vm472, %v777, %v793
    %v802 = vlaneseq
    %v803 = vshrl.u32 %v802, 7
    %v804 = vsub.s32 0, %v803
    %v805 = vrot.slane %v306, %v804
    %v806 = vmul.f32 %v794, %v805
    %v807 = vmul.f32 %v795, %v805
    %v808 = vmul.f32 %v796, %v805
    %v809 = vmul.f32 %v797, %v805
    %v810 = vmul.f32 %v798, %v805
    %v811 = vmul.f32 %v799, %v805
    %v812 = vmul.f32 %v800, %v805
    %v813 = vmul.f32 %v801, %v805
    %v814 = vadd.f32 %v754, %v806
    %v815 = vadd.f32 %v755, %v807
    %v816 = vadd.f32 %v756, %v808
    %v817 = vadd.f32 %v757, %v809
    %v818 = vadd.f32 %v758, %v810
    %v819 = vadd.f32 %v759, %v811
    %v820 = vadd.f32 %v760, %v812
    %v821 = vadd.f32 %v761, %v813
    %v822 = vmax.f32 %v814, 0.0
    %v823 = vmax.f32 %v815, 0.0
    %v824 = vmax.f32 %v816, 0.0
    %v825 = vmax.f32 %v817, 0.0
    %v826 = vmax.f32 %v818, 0.0
    %v827 = vmax.f32 %v819, 0.0
    %v828 = vmax.f32 %v820, 0.0
    %v829 = vmax.f32 %v821, 0.0
    %v830 = vadd.f32 %v249, %v250
    %v831 = vrot.slane %v830, 4
    %v832 = vadd.f32 %v830, %v831
    %v833 = vrot.slane %v832, 2
    %v834 = vadd.f32 %v832, %v833
    %v835 = vrot.slane %v834, 1
    %v836 = vadd.f32 %v834, %v835
    %v837 = vadd.f32 %v251, %v252
    %v838 = vrot.slane %v837, 4
    %v839 = vadd.f32 %v837, %v838
    %v840 = vrot.slane %v839, 2
    %v841 = vadd.f32 %v839, %v840
    %v842 = vrot.slane %v841, 1
    %v843 = vadd.f32 %v841, %v842
    %v844 = vadd.f32 %v253, %v254
    %v845 = vrot.slane %v844, 4
    %v846 = vadd.f32 %v844, %v845
    %v847 = vrot.slane %v846, 2
    %v848 = vadd.f32 %v846, %v847
    %v849 = vrot.slane %v848, 1
    %v850 = vadd.f32 %v848, %v849
    %v851 = vadd.f32 %v255, %v256
    %v852 = vrot.slane %v851, 4
    %v853 = vadd.f32 %v851, %v852
    %v854 = vrot.slane %v853, 2
    %v855 = vadd.f32 %v853, %v854
    %v856 = vrot.slane %v855, 1
    %v857 = vadd.f32 %v855, %v856
    %v858 = vadd.f32 %v822, %v823
    %v859 = vrot.slane %v858, 4
    %v860 = vadd.f32 %v858, %v859
    %v861 = vrot.slane %v860, 2
    %v862 = vadd.f32 %v860, %v861
    %v863 = vrot.slane %v862, 1
    %v864 = vadd.f32 %v862, %v863
    %v865 = vadd.f32 %v824, %v825
    %v866 = vrot.slane %v865, 4
    %v867 = vadd.f32 %v865, %v866
    %v868 = vrot.slane %v867, 2
    %v869 = vadd.f32 %v867, %v868
    %v870 = vrot.slane %v869, 1
    %v871 = vadd.f32 %v869, %v870
    %v872 = vadd.f32 %v826, %v827
    %v873 = vrot.slane %v872, 4
    %v874 = vadd.f32 %v872, %v873
    %v875 = vrot.slane %v874, 2
    %v876 = vadd.f32 %v874, %v875
    %v877 = vrot.slane %v876, 1
    %v878 = vadd.f32 %v876, %v877
    %v879 = vadd.f32 %v828, %v829
    %v880 = vrot.slane %v879, 4
    %v881 = vadd.f32 %v879, %v880
    %v882 = vrot.slane %v881, 2
    %v883 = vadd.f32 %v881, %v882
    %v884 = vrot.slane %v883, 1
    %v885 = vadd.f32 %v883, %v884
    %vm890 = vcmask 1041409
    %v891 = vsel %vm890, %v843, %v836
    %vm892 = vcmask 1042434
    %v893 = vsel %vm892, %v850, %v891
    %vm894 = vcmask 1043459
    %v895 = vsel %vm894, %v857, %v893
    %v901 = vsel %vm890, %v871, %v864
    %v902 = vsel %vm892, %v878, %v901
    %v903 = vsel %vm894, %v885, %v902
    %v905 = vld [vmem:[%s5] sm:$0xff]
    %v906 = vld [vmem:[%s5 + $0x8] sm:$0xff]
    %v907 = vld [vmem:[%s5 + $0x10] sm:$0xff]
    %v908 = vld [vmem:[%s5 + $0x18] sm:$0xff]
    %v909 = vld [vmem:[%s5 + $0x20] sm:$0xff]
    %v910 = vld [vmem:[%s5 + $0x28] sm:$0xff]
    %v911 = vld [vmem:[%s5 + $0x30] sm:$0xff]
    %v912 = vld [vmem:[%s5 + $0x38] sm:$0xff]
    %v913 = vld [vmem:[%s5 + $0x40] sm:$0xff]
    %v914 = vld [vmem:[%s5 + $0x48] sm:$0xff]
    %v915 = vld [vmem:[%s5 + $0x50] sm:$0xff]
    %v916 = vld [vmem:[%s5 + $0x58] sm:$0xff]
    %v917 = vld [vmem:[%s5 + $0x60] sm:$0xff]
    %v918 = vld [vmem:[%s5 + $0x68] sm:$0xff]
    %v919 = vld [vmem:[%s5 + $0x70] sm:$0xff]
    %v920 = vld [vmem:[%s5 + $0x78] sm:$0xff]
    %v921 = vld [vmem:[%s5 + $0x80] sm:$0xff]
    %v922 = vld [vmem:[%s5 + $0x88] sm:$0xff]
    %v923 = vld [vmem:[%s5 + $0x90] sm:$0xff]
    %v924 = vld [vmem:[%s5 + $0x98] sm:$0xff]
    %v925 = vld [vmem:[%s5 + $0xa0] sm:$0xff]
    %v926 = vld [vmem:[%s5 + $0xa8] sm:$0xff]
    %v927 = vld [vmem:[%s5 + $0xb0] sm:$0xff]
    %v928 = vld [vmem:[%s5 + $0xb8] sm:$0xff]
    %v929 = vld [vmem:[%s5 + $0xc0] sm:$0xff]
    %v930 = vld [vmem:[%s5 + $0xc8] sm:$0xff]
    %v931 = vld [vmem:[%s5 + $0xd0] sm:$0xff]
    %v932 = vld [vmem:[%s5 + $0xd8] sm:$0xff]
    %v933 = vld [vmem:[%s5 + $0xe0] sm:$0xff]
    %v934 = vld [vmem:[%s5 + $0xe8] sm:$0xff]
    %v935 = vld [vmem:[%s5 + $0xf0] sm:$0xff]
    %v936 = vld [vmem:[%s5 + $0xf8] sm:$0xff]
    %v937 = vld [vmem:[#allocation11] sm:$0x1]
    %v939 = vlaneseq
    %v940 = vshrl.u32 %v939, 7
    %v941 = vsub.s32 0, %v940
    %v942 = vrot.slane %v937, %v941
    %944 = vmatprep.subr.mxu0 0.0
    %945 = vmatpush1.msra.mxu0 %v920
    %946 = vmatprep.subr.mxu0 0.0
    %947 = vmatpush1.msra.mxu0 %v919
    %948 = vmatprep.subr.mxu0 0.0
    %949 = vmatpush1.msra.mxu0 %v918
    %950 = vmatprep.subr.mxu0 0.0
    %951 = vmatpush1.msra.mxu0 %v917
    %952 = vmatprep.subr.mxu0 0.0
    %953 = vmatpush1.msra.mxu0 %v916
    %954 = vmatprep.subr.mxu0 0.0
    %955 = vmatpush1.msra.mxu0 %v915
    %956 = vmatprep.subr.mxu0 0.0
    %957 = vmatpush1.msra.mxu0 %v914
    %958 = vmatprep.subr.mxu0 0.0
    %959 = vmatpush1.msra.mxu0 %v913
    %960 = vmatprep.subr.mxu0 0.0
    %961 = vmatpush1.msra.mxu0 %v912
    %962 = vmatprep.subr.mxu0 0.0
    %963 = vmatpush1.msra.mxu0 %v911
    %964 = vmatprep.subr.mxu0 0.0
    %965 = vmatpush1.msra.mxu0 %v910
    %966 = vmatprep.subr.mxu0 0.0
    %967 = vmatpush1.msra.mxu0 %v909
    %968 = vmatprep.subr.mxu0 0.0
    %969 = vmatpush1.msra.mxu0 %v908
    %970 = vmatprep.subr.mxu0 0.0
    %971 = vmatpush1.msra.mxu0 %v907
    %972 = vmatprep.subr.mxu0 0.0
    %973 = vmatpush1.msra.mxu0 %v906
    %974 = vmatprep.subr.mxu0 0.0
    %975 = vmatpush1.msra.mxu0 %v905
    %976 = vmatprep.subr.mxu0 0.0
    %977 = vmatpush2.msra.mxu0 %v936
    %978 = vmatprep.subr.mxu0 0.0
    %979 = vmatpush2.msra.mxu0 %v935
    %980 = vmatprep.subr.mxu0 0.0
    %981 = vmatpush2.msra.mxu0 %v934
    %982 = vmatprep.subr.mxu0 0.0
    %983 = vmatpush2.msra.mxu0 %v933
    %984 = vmatprep.subr.mxu0 0.0
    %985 = vmatpush2.msra.mxu0 %v932
    %986 = vmatprep.subr.mxu0 0.0
    %987 = vmatpush2.msra.mxu0 %v931
    %988 = vmatprep.subr.mxu0 0.0
    %989 = vmatpush2.msra.mxu0 %v930
    %990 = vmatprep.subr.mxu0 0.0
    %991 = vmatpush2.msra.mxu0 %v929
    %992 = vmatprep.subr.mxu0 0.0
    %993 = vmatpush2.msra.mxu0 %v928
    %994 = vmatprep.subr.mxu0 0.0
    %995 = vmatpush2.msra.mxu0 %v927
    %996 = vmatprep.subr.mxu0 0.0
    %997 = vmatpush2.msra.mxu0 %v926
    %998 = vmatprep.subr.mxu0 0.0
    %999 = vmatpush2.msra.mxu0 %v925
    %1000 = vmatprep.subr.mxu0 0.0
    %1001 = vmatpush2.msra.mxu0 %v924
    %1002 = vmatprep.subr.mxu0 0.0
    %1003 = vmatpush2.msra.mxu0 %v923
    %1004 = vmatprep.subr.mxu0 0.0
    %1005 = vmatpush2.msra.mxu0 %v922
    %1006 = vmatprep.subr.mxu0 0.0
    %1007 = vmatpush2.msra.mxu0 %v921
    %1008 = vmatprep.mubr.f32.mxu0 %v903
    %1009 = vmatmul.mubr.f32.gmra.mxu0 %v895
    %v1010 = vpop.f32.mrf.mxu0
    %v1011 = vadd.f32 %v942, %v1010
    %v1012 = vpop.f32.mrf.mxu0
    %1013 = vdwg.mxu0
    %v1014 = vmax.f32 %v1011, 0.0
    %v1015 = vld [vmem:[%s7] sm:$0xff]
    %v1016 = vld [vmem:[#allocation12] sm:$0x3]
    %v1018 = vlaneseq
    %v1019 = vshrl.u32 %v1018, 7
    %v1020 = vsub.s32 0, %v1019
    %v1021 = vrot.slane %v1016, %v1020
    %v1022 = vlaneseq
    %v1023 = vshrl.u32 %v1022, 7
    %v1024 = vsub.s32 1, %v1023
    %v1025 = vrot.slane %v1016, %v1024
    %v1029 = vcombine.high %v1015, %v1015
    %vm1030 = vcmask 31744
    %v1032 = vsel %vm1030, %v1014, 0
    %vm1034 = vcmask 1043456
    %v1035 = vsel %vm1034, %v1015, 0
    %v1037 = vsel %vm1034, %v1029, 0
    %1039 = vmatprep.subr.mxu0 0.0
    %1040 = vmatpush1.msra.mxu0 0.0
    %1041 = vmatprep.subr.mxu0 0.0
    %1042 = vmatpush1.msra.mxu0 0.0
    %1043 = vmatprep.subr.mxu0 0.0
    %1044 = vmatpush1.msra.mxu0 0.0
    %1045 = vmatprep.subr.mxu0 0.0
    %1046 = vmatpush1.msra.mxu0 0.0
    %1047 = vmatprep.subr.mxu0 0.0
    %1048 = vmatpush1.msra.mxu0 0.0
    %1049 = vmatprep.subr.mxu0 0.0
    %1050 = vmatpush1.msra.mxu0 0.0
    %1051 = vmatprep.subr.mxu0 0.0
    %1052 = vmatpush1.msra.mxu0 0.0
    %1053 = vmatprep.subr.mxu0 0.0
    %1054 = vmatpush1.msra.mxu0 0.0
    %1055 = vmatprep.subr.mxu0 0.0
    %1056 = vmatpush1.msra.mxu0 0.0
    %1057 = vmatprep.subr.mxu0 0.0
    %1058 = vmatpush1.msra.mxu0 0.0
    %1059 = vmatprep.subr.mxu0 0.0
    %1060 = vmatpush1.msra.mxu0 0.0
    %1061 = vmatprep.subr.mxu0 0.0
    %1062 = vmatpush1.msra.mxu0 0.0
    %1063 = vmatprep.subr.mxu0 0.0
    %1064 = vmatpush1.msra.mxu0 0.0
    %1065 = vmatprep.subr.mxu0 0.0
    %1066 = vmatpush1.msra.mxu0 0.0
    %1067 = vmatprep.subr.mxu0 0.0
    %1068 = vmatpush1.msra.mxu0 0.0
    %1069 = vmatprep.subr.mxu0 %v1037
    %1070 = vmatpush1.msra.mxu0 %v1035
    %1071 = vmatprep.subr.mxu0 0.0
    %1072 = vmatpush2.msra.mxu0 0.0
    %1073 = vmatprep.subr.mxu0 0.0
    %1074 = vmatpush2.msra.mxu0 0.0
    %1075 = vmatprep.subr.mxu0 0.0
    %1076 = vmatpush2.msra.mxu0 0.0
    %1077 = vmatprep.subr.mxu0 0.0
    %1078 = vmatpush2.msra.mxu0 0.0
    %1079 = vmatprep.subr.mxu0 0.0
    %1080 = vmatpush2.msra.mxu0 0.0
    %1081 = vmatprep.subr.mxu0 0.0
    %1082 = vmatpush2.msra.mxu0 0.0
    %1083 = vmatprep.subr.mxu0 0.0
    %1084 = vmatpush2.msra.mxu0 0.0
    %1085 = vmatprep.subr.mxu0 0.0
    %1086 = vmatpush2.msra.mxu0 0.0
    %1087 = vmatprep.subr.mxu0 0.0
    %1088 = vmatpush2.msra.mxu0 0.0
    %1089 = vmatprep.subr.mxu0 0.0
    %1090 = vmatpush2.msra.mxu0 0.0
    %1091 = vmatprep.subr.mxu0 0.0
    %1092 = vmatpush2.msra.mxu0 0.0
    %1093 = vmatprep.subr.mxu0 0.0
    %1094 = vmatpush2.msra.mxu0 0.0
    %1095 = vmatprep.subr.mxu0 0.0
    %1096 = vmatpush2.msra.mxu0 0.0
    %1097 = vmatprep.subr.mxu0 0.0
    %1098 = vmatpush2.msra.mxu0 0.0
    %1099 = vmatprep.subr.mxu0 0.0
    %1100 = vmatpush2.msra.mxu0 0.0
    %1101 = vmatprep.subr.mxu0 0.0
    %1102 = vmatpush2.msra.mxu0 0.0
    %1103 = vmatprep.mubr.f32.mxu0 0.0
    %1104 = vmatmul.mubr.f32.gmra.mxu0 %v1032
    %v1105 = vpop.f32.mrf.mxu0
    %v1106 = vadd.f32 %v1021, %v1105
    %v1107 = vpop.f32.mrf.mxu0
    %v1108 = vadd.f32 %v1025, %v1107
    %1109 = vdwg.mxu0
    %v1110 = vxor.u32 %v1106, 2147483648
    %v1111 = vxor.u32 %v1108, 2147483648
    %v1112 = vmul.f32 %v1110, 1.442695
    %v1113 = vpow.pop %v1112
    %v1114 = vmul.f32 %v1111, 1.442695
    %v1115 = vpow.pop %v1114
    %v1116 = vadd.f32 %v1113, 1.0
    %v1117 = vadd.f32 %v1115, 1.0
    %v1118 = vrcp.pop %v1116
    %v1119 = vmul.f32 1.0, %v1118
    %v1120 = vrcp.pop %v1117
    %v1121 = vmul.f32 1.0, %v1120
    %v1124 = vcombine.low %v1119, %v1121
    %v1126 = vunpack.c.l.s4 1966171168
    %v1127 = vunpack.c.0.s8 %v1126
    %v1128 = vlaneseq
    %v1129 = vshrl.u32 %v1128, 7
    %v1130 = vsub.s32 %v1127, %v1129
    %v1131 = vrot.slane %v1124, %v1130
    %v1132 = vcombine.high %v1131, %v1131
    %v1134 = vunpack.c.l.s4 1966171168
    %v1135 = vunpack.c.0.s8 %v1134
    %v1136 = vlaneseq
    %v1137 = vshrl.u32 %v1136, 7
    %v1138 = vsub.s32 %v1135, %v1137
    %v1139 = vrot.slane %v1131, %v1138
    %v1141 = vunpack.c.l.s4 1966171168
    %v1142 = vunpack.c.0.s8 %v1141
    %v1143 = vlaneseq
    %v1144 = vshrl.u32 %v1143, 7
    %v1145 = vsub.s32 %v1142, %v1144
    %v1146 = vrot.slane %v1132, %v1145
    %v1147 = vcombine.high %v1139, %v1139
    %v1148 = vcombine.high %v1146, %v1146
    %v1149 = vlaneseq
    %v1150 = vshrl.u32 %v1149, 7
    %v1151 = vsub.s32 0, %v1150
    %v1152 = vrot.slane %v1139, %v1151
    %v1153 = vlaneseq
    %v1154 = vshrl.u32 %v1153, 7
    %v1155 = vsub.s32 1, %v1154
    %v1156 = vrot.slane %v1139, %v1155
    %v1157 = vlaneseq
    %v1158 = vshrl.u32 %v1157, 7
    %v1159 = vsub.s32 0, %v1158
    %v1160 = vrot.slane %v1146, %v1159
    %v1161 = vlaneseq
    %v1162 = vshrl.u32 %v1161, 7
    %v1163 = vsub.s32 1, %v1162
    %v1164 = vrot.slane %v1146, %v1163
    %v1165 = vlaneseq
    %v1166 = vshrl.u32 %v1165, 7
    %v1167 = vsub.s32 0, %v1166
    %v1168 = vrot.slane %v1147, %v1167
    %v1169 = vlaneseq
    %v1170 = vshrl.u32 %v1169, 7
    %v1171 = vsub.s32 1, %v1170
    %v1172 = vrot.slane %v1147, %v1171
    %v1173 = vlaneseq
    %v1174 = vshrl.u32 %v1173, 7
    %v1175 = vsub.s32 0, %v1174
    %v1176 = vrot.slane %v1148, %v1175
    %v1177 = vlaneseq
    %v1178 = vshrl.u32 %v1177, 7
    %v1179 = vsub.s32 1, %v1178
    %v1180 = vrot.slane %v1148, %v1179
    %v1189 = vmul.f32 %v249, %v1152
    %v1190 = vmul.f32 %v822, %v1156
    %v1191 = vmul.f32 %v250, %v1152
    %v1192 = vmul.f32 %v823, %v1156
    %v1193 = vmul.f32 %v251, %v1160
    %v1194 = vmul.f32 %v824, %v1164
    %v1195 = vmul.f32 %v252, %v1160
    %v1196 = vmul.f32 %v825, %v1164
    %v1197 = vmul.f32 %v253, %v1168
    %v1198 = vmul.f32 %v826, %v1172
    %v1199 = vmul.f32 %v254, %v1168
    %v1200 = vmul.f32 %v827, %v1172
    %v1201 = vmul.f32 %v255, %v1176
    %v1202 = vmul.f32 %v828, %v1180
    %v1203 = vmul.f32 %v256, %v1176
    %v1204 = vmul.f32 %v829, %v1180
    %v1205 = vld [vmem:[%s9] sm:$0xff]
    %v1206 = vld [vmem:[%s9 + $0x8] sm:$0xff]
    %v1207 = vld [vmem:[%s9 + $0x10] sm:$0xff]
    %v1208 = vld [vmem:[%s9 + $0x18] sm:$0xff]
    %v1209 = vld [vmem:[%s9 + $0x20] sm:$0xff]
    %v1210 = vld [vmem:[%s9 + $0x28] sm:$0xff]
    %v1211 = vld [vmem:[%s9 + $0x30] sm:$0xff]
    %v1212 = vld [vmem:[%s9 + $0x38] sm:$0xff]
    %v1213 = vld [vmem:[%s9 + $0x40] sm:$0xff]
    %v1214 = vld [vmem:[%s9 + $0x48] sm:$0xff]
    %v1215 = vld [vmem:[%s9 + $0x50] sm:$0xff]
    %v1216 = vld [vmem:[%s9 + $0x58] sm:$0xff]
    %v1217 = vld [vmem:[%s9 + $0x60] sm:$0xff]
    %v1218 = vld [vmem:[%s9 + $0x68] sm:$0xff]
    %v1219 = vld [vmem:[%s9 + $0x70] sm:$0xff]
    %v1220 = vld [vmem:[%s9 + $0x78] sm:$0xff]
    %v1221 = vld [vmem:[%s9 + $0x80] sm:$0xff]
    %v1222 = vld [vmem:[%s9 + $0x88] sm:$0xff]
    %v1223 = vld [vmem:[%s9 + $0x90] sm:$0xff]
    %v1224 = vld [vmem:[%s9 + $0x98] sm:$0xff]
    %v1225 = vld [vmem:[%s9 + $0xa0] sm:$0xff]
    %v1226 = vld [vmem:[%s9 + $0xa8] sm:$0xff]
    %v1227 = vld [vmem:[%s9 + $0xb0] sm:$0xff]
    %v1228 = vld [vmem:[%s9 + $0xb8] sm:$0xff]
    %v1229 = vld [vmem:[%s9 + $0xc0] sm:$0xff]
    %v1230 = vld [vmem:[%s9 + $0xc8] sm:$0xff]
    %v1231 = vld [vmem:[%s9 + $0xd0] sm:$0xff]
    %v1232 = vld [vmem:[%s9 + $0xd8] sm:$0xff]
    %v1233 = vld [vmem:[%s9 + $0xe0] sm:$0xff]
    %v1234 = vld [vmem:[%s9 + $0xe8] sm:$0xff]
    %v1235 = vld [vmem:[%s9 + $0xf0] sm:$0xff]
    %v1236 = vld [vmem:[%s9 + $0xf8] sm:$0xff]
    %v1237 = vld [vmem:[%s10] sm:$0x1]
    %v1239 = vlaneseq
    %v1240 = vshrl.u32 %v1239, 7
    %v1241 = vsub.s32 0, %v1240
    %v1242 = vrot.slane %v1237, %v1241
    %1244 = vmatprep.subr.mxu0 0.0
    %1245 = vmatpush1.msra.mxu0 %v1220
    %1246 = vmatprep.subr.mxu0 0.0
    %1247 = vmatpush1.msra.mxu0 %v1219
    %1248 = vmatprep.subr.mxu0 0.0
    %1249 = vmatpush1.msra.mxu0 %v1218
    %1250 = vmatprep.subr.mxu0 0.0
    %1251 = vmatpush1.msra.mxu0 %v1217
    %1252 = vmatprep.subr.mxu0 0.0
    %1253 = vmatpush1.msra.mxu0 %v1216
    %1254 = vmatprep.subr.mxu0 0.0
    %1255 = vmatpush1.msra.mxu0 %v1215
    %1256 = vmatprep.subr.mxu0 0.0
    %1257 = vmatpush1.msra.mxu0 %v1214
    %1258 = vmatprep.subr.mxu0 0.0
    %1259 = vmatpush1.msra.mxu0 %v1213
    %1260 = vmatprep.subr.mxu0 0.0
    %1261 = vmatpush1.msra.mxu0 %v1212
    %1262 = vmatprep.subr.mxu0 0.0
    %1263 = vmatpush1.msra.mxu0 %v1211
    %1264 = vmatprep.subr.mxu0 0.0
    %1265 = vmatpush1.msra.mxu0 %v1210
    %1266 = vmatprep.subr.mxu0 0.0
    %1267 = vmatpush1.msra.mxu0 %v1209
    %1268 = vmatprep.subr.mxu0 0.0
    %1269 = vmatpush1.msra.mxu0 %v1208
    %1270 = vmatprep.subr.mxu0 0.0
    %1271 = vmatpush1.msra.mxu0 %v1207
    %1272 = vmatprep.subr.mxu0 0.0
    %1273 = vmatpush1.msra.mxu0 %v1206
    %1274 = vmatprep.subr.mxu0 0.0
    %1275 = vmatpush1.msra.mxu0 %v1205
    %1276 = vmatprep.subr.mxu0 0.0
    %1277 = vmatpush2.msra.mxu0 %v1236
    %1278 = vmatprep.subr.mxu0 0.0
    %1279 = vmatpush2.msra.mxu0 %v1235
    %1280 = vmatprep.subr.mxu0 0.0
    %1281 = vmatpush2.msra.mxu0 %v1234
    %1282 = vmatprep.subr.mxu0 0.0
    %1283 = vmatpush2.msra.mxu0 %v1233
    %1284 = vmatprep.subr.mxu0 0.0
    %1285 = vmatpush2.msra.mxu0 %v1232
    %1286 = vmatprep.subr.mxu0 0.0
    %1287 = vmatpush2.msra.mxu0 %v1231
    %1288 = vmatprep.subr.mxu0 0.0
    %1289 = vmatpush2.msra.mxu0 %v1230
    %1290 = vmatprep.subr.mxu0 0.0
    %1291 = vmatpush2.msra.mxu0 %v1229
    %1292 = vmatprep.subr.mxu0 0.0
    %1293 = vmatpush2.msra.mxu0 %v1228
    %1294 = vmatprep.subr.mxu0 0.0
    %1295 = vmatpush2.msra.mxu0 %v1227
    %1296 = vmatprep.subr.mxu0 0.0
    %1297 = vmatpush2.msra.mxu0 %v1226
    %1298 = vmatprep.subr.mxu0 0.0
    %1299 = vmatpush2.msra.mxu0 %v1225
    %1300 = vmatprep.subr.mxu0 0.0
    %1301 = vmatpush2.msra.mxu0 %v1224
    %1302 = vmatprep.subr.mxu0 0.0
    %1303 = vmatpush2.msra.mxu0 %v1223
    %1304 = vmatprep.subr.mxu0 0.0
    %1305 = vmatpush2.msra.mxu0 %v1222
    %1306 = vmatprep.subr.mxu0 0.0
    %1307 = vmatpush2.msra.mxu0 %v1221
    %1308 = vmatprep.mubr.f32.mxu0 %v1190
    %1309 = vmatmul.mubr.f32.gmra.mxu0 %v1189
    %v1310 = vpop.f32.mrf.mxu0
    %v1311 = vadd.f32 %v1242, %v1310
    %v1312 = vpop.f32.mrf.mxu0
    %1313 = vmatprep.mubr.f32.mxu0 %v1192
    %1314 = vmatmul.mubr.f32.gmra.mxu0 %v1191
    %v1315 = vpop.f32.mrf.mxu0
    %v1316 = vadd.f32 %v1242, %v1315
    %v1317 = vpop.f32.mrf.mxu0
    %1318 = vmatprep.mubr.f32.mxu0 %v1194
    %1319 = vmatmul.mubr.f32.gmra.mxu0 %v1193
    %v1320 = vpop.f32.mrf.mxu0
    %v1321 = vadd.f32 %v1242, %v1320
    %v1322 = vpop.f32.mrf.mxu0
    %1323 = vmatprep.mubr.f32.mxu0 %v1196
    %1324 = vmatmul.mubr.f32.gmra.mxu0 %v1195
    %v1325 = vpop.f32.mrf.mxu0
    %v1326 = vadd.f32 %v1242, %v1325
    %v1327 = vpop.f32.mrf.mxu0
    %1328 = vmatprep.mubr.f32.mxu0 %v1198
    %1329 = vmatmul.mubr.f32.gmra.mxu0 %v1197
    %v1330 = vpop.f32.mrf.mxu0
    %v1331 = vadd.f32 %v1242, %v1330
    %v1332 = vpop.f32.mrf.mxu0
    %1333 = vmatprep.mubr.f32.mxu0 %v1200
    %1334 = vmatmul.mubr.f32.gmra.mxu0 %v1199
    %v1335 = vpop.f32.mrf.mxu0
    %v1336 = vadd.f32 %v1242, %v1335
    %v1337 = vpop.f32.mrf.mxu0
    %1338 = vmatprep.mubr.f32.mxu0 %v1202
    %1339 = vmatmul.mubr.f32.gmra.mxu0 %v1201
    %v1340 = vpop.f32.mrf.mxu0
    %v1341 = vadd.f32 %v1242, %v1340
    %v1342 = vpop.f32.mrf.mxu0
    %1343 = vmatprep.mubr.f32.mxu0 %v1204
    %1344 = vmatmul.mubr.f32.gmra.mxu0 %v1203
    %v1345 = vpop.f32.mrf.mxu0
    %v1346 = vadd.f32 %v1242, %v1345
    %v1347 = vpop.f32.mrf.mxu0
    %1348 = vdwg.mxu0
    %v1349 = vmax.f32 %v1311, 0.0
    %v1350 = vmax.f32 %v1316, 0.0
    %v1351 = vmax.f32 %v1321, 0.0
    %v1352 = vmax.f32 %v1326, 0.0
    %v1353 = vmax.f32 %v1331, 0.0
    %v1354 = vmax.f32 %v1336, 0.0
    %v1355 = vmax.f32 %v1341, 0.0
    %v1356 = vmax.f32 %v1346, 0.0
    %1357 = vst [vmem:[#allocation14] sm:$0xff] %v1349
    %1358 = vst [vmem:[#allocation14 + $0x8] sm:$0xff] %v1350
    %1359 = vst [vmem:[#allocation14 + $0x10] sm:$0xff] %v1351
    %1360 = vst [vmem:[#allocation14 + $0x18] sm:$0xff] %v1352
    %1361 = vst [vmem:[#allocation14 + $0x20] sm:$0xff] %v1353
    %1362 = vst [vmem:[#allocation14 + $0x28] sm:$0xff] %v1354
    %1363 = vst [vmem:[#allocation14 + $0x30] sm:$0xff] %v1355
    %1364 = vst [vmem:[#allocation14 + $0x38] sm:$0xff] %v1356
    // Predicated region
    $region70: #{tpu_custom_call.1} parent=1 // pred_check
      _
    $region71: #{tpu_custom_call.1} parent=1 // pred_check_branch
      %1366 = sbr.rel (0) target = $region73
    $region72: #{tpu_custom_call.1} parent=1 // pred_region
      %s1368 = ssub.s32 1024, 1024
      %1369 = vsyncadd [#allocation5], %s1368
      %s1370 = sshll.u32 [#allocation14], 4
      %s1371 = int_to_ptr.vmem [resolvable:$true] %s1370
      %1376 = dma.vmem_to_hbm [thread:$0]  %s1371, 1024, %s11, [#allocation5], 128, 128, 8
    $region73: #{tpu_custom_call.1} parent=1 // pred_fallthru
      _
    // Predicated region
    $region74: #{tpu_custom_call.1} parent=1 // pred_check
      _
    $region75: #{tpu_custom_call.1} parent=1 // pred_check_branch
      %1378 = sbr.rel (0) target = $region77
    $region76: #{tpu_custom_call.1} parent=1 // pred_region
      %1379 = dma.done [#allocation5], 1024
    $region77: #{tpu_custom_call.1} parent=1 // pred_fallthru
      _
    %1380 = vsyncpa [#allocation4], 1
    %1381 = vsyncpa [#allocation7], 1
    %1382 = vsyncpa [#allocation10], 1
    %1383 = vsyncpa [#allocation13], 1
    %1384 = vsyncpa [#allocation5], 1

</llo_original>
